<compile_context>
chip_gen: v7x
topology: tpu7x:2x2x1
jax: 0.10.0
libtpu: 0.0.40
codegen_flags: <defaults>
</compile_context>

<pallas_src>
import functools

import jax
import jax.numpy as jnp
import numpy as np
from jax.experimental import pallas as pl
from jax.experimental.pallas import tpu as pltpu

EPS = 1e-5      # BatchNorm2d default eps
SLOPE = 0.2     # LeakyReLU negative slope
TILE_CAP = 8192 # pixel-tile cap (per review: amortizes grid-step overhead,
                # ~16-20 MiB of f32 temporaries -> fits the 48 MiB VMEM limit)


def _lrelu(v):
    return jnp.where(v > 0, v, SLOPE * v)


def _choose_tile(hw, cap=TILE_CAP):
    """Lane-aligned pixel tile (multiple of 128) and tile count; HW is padded
    up to tile*count in the wrapper."""
    hw128 = -(-hw // 128) * 128
    if hw128 <= cap:
        return hw128, 1
    t = -(-hw128 // cap)
    tile = -(-hw128 // (t * 128)) * 128
    return tile, t


# ---------------------------------------------------------------------------
# Pass A: per-sample BatchNorm statistics, accumulated across pixel tiles.
#   x_ref    : (Cin_p, TILE) bf16   (pixels on lanes)
#   stat_ref : (2, C2) f32 resident output block; row 0 = sum, row 1 = sum-sq.
# Padded pixels (global index >= hw) are masked out of the sums.
# ---------------------------------------------------------------------------
def _stats_kernel(x_ref, w1_ref, b1_ref, w2_ref, stat_ref, *, hw, tile):
    t = pl.program_id(1)

    @pl.when(t == 0)
    def _():
        stat_ref[...] = jnp.zeros_like(stat_ref)

    x = x_ref[...]                                                   # bf16
    y1 = jnp.dot(w1_ref[...], x, preferred_element_type=jnp.float32)
    y1 = _lrelu(y1 + b1_ref[...])                                    # (ndf, TILE) f32
    y2 = jnp.dot(w2_ref[...], y1.astype(jnp.bfloat16),
                 preferred_element_type=jnp.float32)                 # (C2, TILE) f32

    lane = jax.lax.broadcasted_iota(jnp.int32, y2.shape, dimension=1)
    valid = (t * tile + lane) < hw
    y2 = jnp.where(valid, y2, 0.0)

    ssum = jnp.sum(y2, axis=-1, keepdims=True)                       # (C2, 1)
    ssq = jnp.sum(y2 * y2, axis=-1, keepdims=True)                   # (C2, 1)
    # Single (C2,2)->(2,C2) transpose (XLU is idle here) gives lane-dense rows.
    stat_ref[...] += jnp.concatenate([ssum, ssq], axis=1).T          # (2, C2)


# ---------------------------------------------------------------------------
# Pass B: recompute y2 per tile, apply folded BatchNorm (scale/shift),
# LeakyReLU and the final 1x1 conv.  Output block (1, TILE) is lane-dense.
# ---------------------------------------------------------------------------
def _apply_kernel(x_ref, w1_ref, b1_ref, w2_ref, scale_ref, shift_ref, w3_ref,
                  out_ref):
    x = x_ref[...]
    y1 = jnp.dot(w1_ref[...], x, preferred_element_type=jnp.float32)
    y1 = _lrelu(y1 + b1_ref[...])
    y2 = jnp.dot(w2_ref[...], y1.astype(jnp.bfloat16),
                 preferred_element_type=jnp.float32)
    y3 = _lrelu(y2 * scale_ref[...] + shift_ref[...])                # BN + lrelu
    out_ref[...] = jnp.dot(w3_ref[...], y3.astype(jnp.bfloat16),
                           preferred_element_type=jnp.float32)       # (1, TILE)


@jax.jit
def pixel_discriminator(x_nchw, params):
    """Forward of PixelDiscriminator. x: (N, input_nc, H, W). Returns (N,1,H,W)."""
    N, Cin, H, W = x_nchw.shape
    HW = H * W
    ndf = params["w1"].shape[0]
    C2 = 2 * ndf
    TILE, T = _choose_tile(HW)
    HWp = TILE * T
    Cin_p = ((Cin + 7) // 8) * 8   # pad tiny contraction dim to a sublane multiple

    # Layout plumbing (cheap): NCHW -> (N, C, HW), bf16, zero-pad Cin and HW.
    xk = jnp.pad(x_nchw.reshape(N, Cin, HW).astype(jnp.bfloat16),
                 ((0, 0), (0, Cin_p - Cin), (0, HWp - HW)))
    w1 = jnp.pad(params["w1"], ((0, 0), (0, Cin_p - Cin))).astype(jnp.bfloat16)
    b1 = params["b1"].reshape(ndf, 1).astype(jnp.float32)
    w2 = params["w2"].astype(jnp.bfloat16)
    w3 = params["w3"].astype(jnp.bfloat16)

    x_spec = pl.BlockSpec((None, Cin_p, TILE), lambda n, t: (n, 0, t))

    def full_spec(a):
        zeros = (0,) * a.ndim
        return pl.BlockSpec(a.shape, lambda n, t: zeros)

    # 48 MiB scoped VMEM: plenty for the ~16-20 MiB of f32 temporaries at
    # TILE=8192, with headroom below v7x's 64 MiB physical per TC.
    vmem_limit = 48 * 1024 * 1024

    # ---- pass A: per-sample BN statistics (n parallel, t reduction) --------
    stats = pl.pallas_call(
        functools.partial(_stats_kernel, hw=HW, tile=TILE),
        out_shape=jax.ShapeDtypeStruct((N, 2, C2), jnp.float32),
        grid=(N, T),
        in_specs=[x_spec, full_spec(w1), full_spec(b1), full_spec(w2)],
        out_specs=pl.BlockSpec((None, 2, C2), lambda n, t: (n, 0, 0)),
        compiler_params=pltpu.CompilerParams(
            dimension_semantics=("parallel", "arbitrary"),
            vmem_limit_bytes=vmem_limit,
        ),
    )(xk, w1, b1, w2)

    # ---- finalize statistics & fold gamma/beta (tiny plain-JAX ops) --------
    # TODO(synk): variance via E[x^2]-mean^2 can lose precision when
    # |mean| >> std; a shifted accumulation would tighten it if needed.
    tot = jnp.sum(stats, axis=0)                                     # (2, C2)
    count = jnp.float32(N * HW)
    mean = tot[0] / count
    var = jnp.maximum(tot[1] / count - mean * mean, 0.0)
    inv = params["gamma"] * jax.lax.rsqrt(var + EPS)                 # gamma/sqrt(var+eps)
    scale = inv.reshape(C2, 1).astype(jnp.float32)
    shift = (params["beta"] - mean * inv).reshape(C2, 1).astype(jnp.float32)

    # ---- pass B: recompute + normalize + LeakyReLU + final 1x1 conv --------
    out = pl.pallas_call(
        _apply_kernel,
        out_shape=jax.ShapeDtypeStruct((N, 1, HWp), jnp.float32),
        grid=(N, T),
        in_specs=[x_spec, full_spec(w1), full_spec(b1), full_spec(w2),
                  full_spec(scale), full_spec(shift), full_spec(w3)],
        out_specs=pl.BlockSpec((None, 1, TILE), lambda n, t: (n, 0, t)),
        compiler_params=pltpu.CompilerParams(
            dimension_semantics=("parallel", "parallel"),
            vmem_limit_bytes=vmem_limit,
        ),
    )(xk, w1, b1, w2, scale, shift, w3)

    return out[:, :, :HW].reshape(N, 1, H, W)


# ---------------------------------------------------------------------------
# Deterministic parameter init (pix2pix-style: conv weights ~ N(0, 0.02),
# BatchNorm weight ~ N(1, 0.02), bias 0).  conv2/conv3 have no bias
# because the norm layer is BatchNorm2d (use_bias=False).
# ---------------------------------------------------------------------------
def init_params(key, input_nc, ndf):
    ks = jax.random.split(key, 5)
    n = lambda k, shp, s: jax.random.normal(k, shp, jnp.float32) * s
    return dict(
        w1=n(ks[0], (ndf, input_nc), 0.02),
        b1=n(ks[1], (ndf,), 0.01),
        w2=n(ks[2], (2 * ndf, ndf), 0.02),
        w3=n(ks[3], (1, 2 * ndf), 0.02),
        gamma=1.0 + n(ks[4], (2 * ndf,), 0.02),
        beta=jnp.zeros((2 * ndf,), jnp.float32),
    )


# Pure-JAX f32 reference (mirrors the PyTorch forward in train mode).
def reference_forward(x, P):
    hp = jax.lax.Precision.HIGHEST
    y1 = jnp.einsum("oc,nchw->nohw", P["w1"], x, precision=hp)
    y1 = _lrelu(y1 + P["b1"][None, :, None, None])
    y2 = jnp.einsum("oc,nchw->nohw", P["w2"], y1, precision=hp)
    m = jnp.mean(y2, axis=(0, 2, 3), keepdims=True)
    v = jnp.mean((y2 - m) ** 2, axis=(0, 2, 3), keepdims=True)
    y3 = (y2 - m) * jax.lax.rsqrt(v + EPS)
    y3 = y3 * P["gamma"][None, :, None, None] + P["beta"][None, :, None, None]
    y3 = _lrelu(y3)
    return jnp.einsum("oc,nchw->nohw", P["w3"], y3, precision=hp)


if __name__ == "__main__":
    input_nc, ndf = 3, 64
    N, H, W = 2, 16, 16

    key = jax.random.PRNGKey(0)
    kx, kp = jax.random.split(key)
    x = jax.random.normal(kx, (N, input_nc, H, W), jnp.float32)
    P = init_params(kp, input_nc, ndf)

    out = pixel_discriminator(x, P)
    out = jax.block_until_ready(out)
    assert out.shape == (N, 1, H, W)

    ref = reference_forward(x, P)
    # bf16 MXU inputs with f32 accumulation -> modestly loose tolerance vs f32 ref.
    np.testing.assert_allclose(np.asarray(out), np.asarray(ref), rtol=5e-2, atol=2e-2)

    print("KERNEL_OK")
</pallas_src>

<mosaic_0001>
module attributes {stable_mosaic.version = 11 : i64} {
  func.func @_stats_kernel(%arg0: i32, %arg1: i32, %arg2: memref<1x8x256xbf16, #tpu.memory_space<vmem>>, %arg3: memref<64x8xbf16, #tpu.memory_space<vmem>>, %arg4: memref<64x1xf32, #tpu.memory_space<vmem>>, %arg5: memref<128x64xbf16, #tpu.memory_space<vmem>>, %arg6: memref<1x2x128xf32, #tpu.memory_space<vmem>>) attributes {dimension_semantics = [#tpu.dimension_semantics<parallel>, #tpu.dimension_semantics<arbitrary>], iteration_bounds = array<i64: 2, 1>, scalar_prefetch = 0 : i64, scratch_operands = 0 : i64, tpu.core_type = #tpu.core_type<tc>, window_params = [{transform_indices = @transform_0, window_bounds = array<i64: 1, 8, 256>}, {pipeline_mode = #tpu.pipeline_mode<synchronous>, transform_indices = @transform_1, window_bounds = array<i64: 64, 8>}, {pipeline_mode = #tpu.pipeline_mode<synchronous>, transform_indices = @transform_2, window_bounds = array<i64: 64, 1>}, {pipeline_mode = #tpu.pipeline_mode<synchronous>, transform_indices = @transform_3, window_bounds = array<i64: 128, 64>}, {transform_indices = @transform_4, window_bounds = array<i64: 1, 2, 128>}]} {
    %c0_i32 = arith.constant 0 : i32
    %0 = arith.cmpi eq, %arg1, %c0_i32 : i32
    %1 = arith.extui %0 : i1 to i32
    %c0_i32_0 = arith.constant 0 : i32
    %2 = arith.cmpi ne, %1, %c0_i32_0 : i32
    scf.if %2 {
      %cst_22 = arith.constant 0.000000e+00 : f32
      %39 = vector.broadcast %cst_22 : f32 to vector<2x128xf32>
      %c0_23 = arith.constant 0 : index
      %c0_24 = arith.constant 0 : index
      %c0_25 = arith.constant 0 : index
      %40 = vector.load %arg6[%c0_23, %c0_24, %c0_25] : memref<1x2x128xf32, #tpu.memory_space<vmem>>, vector<1x2x128xf32>
      %41 = vector.shape_cast %40 : vector<1x2x128xf32> to vector<2x128xf32>
      %42 = vector.shape_cast %39 : vector<2x128xf32> to vector<1x2x128xf32>
      tpu.vector_store %arg6[%c0_23, %c0_24, %c0_25], %42 {strides = array<i32>} : memref<1x2x128xf32, #tpu.memory_space<vmem>>, vector<1x2x128xf32>,
    } else {
    }
    %c0 = arith.constant 0 : index
    %c0_1 = arith.constant 0 : index
    %c0_2 = arith.constant 0 : index
    %3 = vector.load %arg2[%c0, %c0_1, %c0_2] : memref<1x8x256xbf16, #tpu.memory_space<vmem>>, vector<1x8x256xbf16>
    %4 = vector.shape_cast %3 : vector<1x8x256xbf16> to vector<8x256xbf16>
    %c0_3 = arith.constant 0 : index
    %c0_4 = arith.constant 0 : index
    %5 = vector.load %arg3[%c0_3, %c0_4] : memref<64x8xbf16, #tpu.memory_space<vmem>>, vector<64x8xbf16>
    %cst = arith.constant dense<0.000000e+00> : vector<64x256xf32>
    %6 = tpu.matmul %5, %4, %cst {dimension_numbers = #tpu.dot_dimension_numbers<[1], [0], [0], [1], [0, 0, 1, 1], [], []>} : vector<64x8xbf16>, vector<8x256xbf16>, vector<64x256xf32> -> vector<64x256xf32>
    %c0_5 = arith.constant 0 : index
    %c0_6 = arith.constant 0 : index
    %7 = vector.load %arg4[%c0_5, %c0_6] : memref<64x1xf32, #tpu.memory_space<vmem>>, vector<64x1xf32>
    %8 = vector.broadcast %7 : vector<64x1xf32> to vector<64x256xf32>
    %9 = arith.addf %6, %8 : vector<64x256xf32>
    %cst_7 = arith.constant 0.000000e+00 : f32
    %10 = vector.broadcast %cst_7 : f32 to vector<64x256xf32>
    %11 = arith.cmpf ogt, %9, %10 : vector<64x256xf32>
    %cst_8 = arith.constant 2.000000e-01 : f32
    %12 = vector.broadcast %cst_8 : f32 to vector<64x256xf32>
    %13 = arith.mulf %12, %9 : vector<64x256xf32>
    %14 = arith.select %11, %9, %13 : vector<64x256xi1>, vector<64x256xf32>
    %c0_9 = arith.constant 0 : index
    %c0_10 = arith.constant 0 : index
    %15 = vector.load %arg5[%c0_9, %c0_10] : memref<128x64xbf16, #tpu.memory_space<vmem>>, vector<128x64xbf16>
    %16 = arith.truncf %14 : vector<64x256xf32> to vector<64x256xbf16>
    %cst_11 = arith.constant dense<0.000000e+00> : vector<128x256xf32>
    %17 = tpu.matmul %15, %16, %cst_11 {dimension_numbers = #tpu.dot_dimension_numbers<[1], [0], [0], [1], [0, 0, 1, 1], [], []>} : vector<128x64xbf16>, vector<64x256xbf16>, vector<128x256xf32> -> vector<128x256xf32>
    %18 = tpu.iota {dimensions = array<i32: 1>} : vector<128x256xi32>
    %c256_i32 = arith.constant 256 : i32
    %19 = arith.muli %arg1, %c256_i32 : i32
    %20 = vector.broadcast %19 : i32 to vector<128x256xi32>
    %21 = arith.addi %20, %18 : vector<128x256xi32>
    %c256_i32_12 = arith.constant 256 : i32
    %22 = vector.broadcast %c256_i32_12 : i32 to vector<128x256xi32>
    %23 = arith.cmpi slt, %21, %22 : vector<128x256xi32>
    %cst_13 = arith.constant 0.000000e+00 : f32
    %24 = vector.broadcast %cst_13 : f32 to vector<128x256xf32>
    %25 = arith.select %23, %17, %24 : vector<128x256xi1>, vector<128x256xf32>
    %cst_14 = arith.constant dense<0.000000e+00> : vector<128xf32>
    %26 = vector.multi_reduction <add>, %25, %cst_14 [1] : vector<128x256xf32> to vector<128xf32>
    %27 = vector.shape_cast %26 : vector<128xf32> to vector<128x1xf32>
    %28 = arith.mulf %25, %25 : vector<128x256xf32>
    %cst_15 = arith.constant dense<0.000000e+00> : vector<128xf32>
    %29 = vector.multi_reduction <add>, %28, %cst_15 [1] : vector<128x256xf32> to vector<128xf32>
    %30 = vector.shape_cast %29 : vector<128xf32> to vector<128x1xf32>
    %c0_16 = arith.constant 0 : index
    %c0_17 = arith.constant 0 : index
    %c0_18 = arith.constant 0 : index
    %31 = vector.load %arg6[%c0_16, %c0_17, %c0_18] : memref<1x2x128xf32, #tpu.memory_space<vmem>>, vector<1x2x128xf32>
    %32 = vector.shape_cast %31 : vector<1x2x128xf32> to vector<2x128xf32>
    %33 = tpu.concatenate %27, %30 in 1 : vector<128x1xf32>, vector<128x1xf32> -> vector<128x2xf32>
    %34 = tpu.transpose %33, [1, 0] : vector<128x2xf32> -> vector<2x128xf32>
    %35 = arith.addf %32, %34 : vector<2x128xf32>
    %c0_19 = arith.constant 0 : index
    %c0_20 = arith.constant 0 : index
    %c0_21 = arith.constant 0 : index
    %36 = vector.load %arg6[%c0_19, %c0_20, %c0_21] : memref<1x2x128xf32, #tpu.memory_space<vmem>>, vector<1x2x128xf32>
    %37 = vector.shape_cast %36 : vector<1x2x128xf32> to vector<2x128xf32>
    %38 = vector.shape_cast %35 : vector<2x128xf32> to vector<1x2x128xf32>
    tpu.vector_store %arg6[%c0_19, %c0_20, %c0_21], %38 {strides = array<i32>} : memref<1x2x128xf32, #tpu.memory_space<vmem>>, vector<1x2x128xf32>,
    return
  }
  func.func @transform_0(%arg0: i32, %arg1: i32) -> (i32, i32, i32) {
    %c0_i32 = arith.constant 0 : i32
    %c0_i32_0 = arith.constant 0 : i32
    return %arg0, %c0_i32, %arg1 : i32, i32, i32
  }
  func.func @transform_1(%arg0: i32, %arg1: i32) -> (i32, i32) {
    %c0_i32 = arith.constant 0 : i32
    %c0_i32_0 = arith.constant 0 : i32
    %c0_i32_1 = arith.constant 0 : i32
    return %c0_i32, %c0_i32_0 : i32, i32
  }
  func.func @transform_2(%arg0: i32, %arg1: i32) -> (i32, i32) {
    %c0_i32 = arith.constant 0 : i32
    %c0_i32_0 = arith.constant 0 : i32
    %c0_i32_1 = arith.constant 0 : i32
    return %c0_i32, %c0_i32_0 : i32, i32
  }
  func.func @transform_3(%arg0: i32, %arg1: i32) -> (i32, i32) {
    %c0_i32 = arith.constant 0 : i32
    %c0_i32_0 = arith.constant 0 : i32
    %c0_i32_1 = arith.constant 0 : i32
    return %c0_i32, %c0_i32_0 : i32, i32
  }
  func.func @transform_4(%arg0: i32, %arg1: i32) -> (i32, i32, i32) {
    %c0_i32 = arith.constant 0 : i32
    %c0_i32_0 = arith.constant 0 : i32
    %c0_i32_1 = arith.constant 0 : i32
    return %arg0, %c0_i32, %c0_i32_0 : i32, i32, i32
  }
}

module attributes {stable_mosaic.version = 11 : i64} {
  func.func @_apply_kernel(%arg0: i32, %arg1: i32, %arg2: memref<1x8x256xbf16, #tpu.memory_space<vmem>>, %arg3: memref<64x8xbf16, #tpu.memory_space<vmem>>, %arg4: memref<64x1xf32, #tpu.memory_space<vmem>>, %arg5: memref<128x64xbf16, #tpu.memory_space<vmem>>, %arg6: memref<128x1xf32, #tpu.memory_space<vmem>>, %arg7: memref<128x1xf32, #tpu.memory_space<vmem>>, %arg8: memref<1x128xbf16, #tpu.memory_space<vmem>>, %arg9: memref<1x1x256xf32, #tpu.memory_space<vmem>>) attributes {dimension_semantics = [#tpu.dimension_semantics<parallel>, #tpu.dimension_semantics<parallel>], iteration_bounds = array<i64: 2, 1>, scalar_prefetch = 0 : i64, scratch_operands = 0 : i64, tpu.core_type = #tpu.core_type<tc>, window_params = [{transform_indices = @transform_0, window_bounds = array<i64: 1, 8, 256>}, {pipeline_mode = #tpu.pipeline_mode<synchronous>, transform_indices = @transform_1, window_bounds = array<i64: 64, 8>}, {pipeline_mode = #tpu.pipeline_mode<synchronous>, transform_indices = @transform_2, window_bounds = array<i64: 64, 1>}, {pipeline_mode = #tpu.pipeline_mode<synchronous>, transform_indices = @transform_3, window_bounds = array<i64: 128, 64>}, {pipeline_mode = #tpu.pipeline_mode<synchronous>, transform_indices = @transform_4, window_bounds = array<i64: 128, 1>}, {pipeline_mode = #tpu.pipeline_mode<synchronous>, transform_indices = @transform_5, window_bounds = array<i64: 128, 1>}, {pipeline_mode = #tpu.pipeline_mode<synchronous>, transform_indices = @transform_6, window_bounds = array<i64: 1, 128>}, {transform_indices = @transform_7, window_bounds = array<i64: 1, 1, 256>}]} {
    %c0 = arith.constant 0 : index
    %c0_0 = arith.constant 0 : index
    %c0_1 = arith.constant 0 : index
    %0 = vector.load %arg2[%c0, %c0_0, %c0_1] : memref<1x8x256xbf16, #tpu.memory_space<vmem>>, vector<1x8x256xbf16>
    %1 = vector.shape_cast %0 : vector<1x8x256xbf16> to vector<8x256xbf16>
    %c0_2 = arith.constant 0 : index
    %c0_3 = arith.constant 0 : index
    %2 = vector.load %arg3[%c0_2, %c0_3] : memref<64x8xbf16, #tpu.memory_space<vmem>>, vector<64x8xbf16>
    %cst = arith.constant dense<0.000000e+00> : vector<64x256xf32>
    %3 = tpu.matmul %2, %1, %cst {dimension_numbers = #tpu.dot_dimension_numbers<[1], [0], [0], [1], [0, 0, 1, 1], [], []>} : vector<64x8xbf16>, vector<8x256xbf16>, vector<64x256xf32> -> vector<64x256xf32>
    %c0_4 = arith.constant 0 : index
    %c0_5 = arith.constant 0 : index
    %4 = vector.load %arg4[%c0_4, %c0_5] : memref<64x1xf32, #tpu.memory_space<vmem>>, vector<64x1xf32>
    %5 = vector.broadcast %4 : vector<64x1xf32> to vector<64x256xf32>
    %6 = arith.addf %3, %5 : vector<64x256xf32>
    %cst_6 = arith.constant 0.000000e+00 : f32
    %7 = vector.broadcast %cst_6 : f32 to vector<64x256xf32>
    %8 = arith.cmpf ogt, %6, %7 : vector<64x256xf32>
    %cst_7 = arith.constant 2.000000e-01 : f32
    %9 = vector.broadcast %cst_7 : f32 to vector<64x256xf32>
    %10 = arith.mulf %9, %6 : vector<64x256xf32>
    %11 = arith.select %8, %6, %10 : vector<64x256xi1>, vector<64x256xf32>
    %c0_8 = arith.constant 0 : index
    %c0_9 = arith.constant 0 : index
    %12 = vector.load %arg5[%c0_8, %c0_9] : memref<128x64xbf16, #tpu.memory_space<vmem>>, vector<128x64xbf16>
    %13 = arith.truncf %11 : vector<64x256xf32> to vector<64x256xbf16>
    %cst_10 = arith.constant dense<0.000000e+00> : vector<128x256xf32>
    %14 = tpu.matmul %12, %13, %cst_10 {dimension_numbers = #tpu.dot_dimension_numbers<[1], [0], [0], [1], [0, 0, 1, 1], [], []>} : vector<128x64xbf16>, vector<64x256xbf16>, vector<128x256xf32> -> vector<128x256xf32>
    %c0_11 = arith.constant 0 : index
    %c0_12 = arith.constant 0 : index
    %15 = vector.load %arg6[%c0_11, %c0_12] : memref<128x1xf32, #tpu.memory_space<vmem>>, vector<128x1xf32>
    %16 = vector.broadcast %15 : vector<128x1xf32> to vector<128x256xf32>
    %17 = arith.mulf %14, %16 : vector<128x256xf32>
    %c0_13 = arith.constant 0 : index
    %c0_14 = arith.constant 0 : index
    %18 = vector.load %arg7[%c0_13, %c0_14] : memref<128x1xf32, #tpu.memory_space<vmem>>, vector<128x1xf32>
    %19 = vector.broadcast %18 : vector<128x1xf32> to vector<128x256xf32>
    %20 = arith.addf %17, %19 : vector<128x256xf32>
    %cst_15 = arith.constant 0.000000e+00 : f32
    %21 = vector.broadcast %cst_15 : f32 to vector<128x256xf32>
    %22 = arith.cmpf ogt, %20, %21 : vector<128x256xf32>
    %cst_16 = arith.constant 2.000000e-01 : f32
    %23 = vector.broadcast %cst_16 : f32 to vector<128x256xf32>
    %24 = arith.mulf %23, %20 : vector<128x256xf32>
    %25 = arith.select %22, %20, %24 : vector<128x256xi1>, vector<128x256xf32>
    %c0_17 = arith.constant 0 : index
    %c0_18 = arith.constant 0 : index
    %26 = vector.load %arg8[%c0_17, %c0_18] : memref<1x128xbf16, #tpu.memory_space<vmem>>, vector<1x128xbf16>
    %27 = arith.truncf %25 : vector<128x256xf32> to vector<128x256xbf16>
    %cst_19 = arith.constant dense<0.000000e+00> : vector<1x256xf32>
    %28 = tpu.matmul %26, %27, %cst_19 {dimension_numbers = #tpu.dot_dimension_numbers<[1], [0], [0], [1], [0, 0, 1, 1], [], []>} : vector<1x128xbf16>, vector<128x256xbf16>, vector<1x256xf32> -> vector<1x256xf32>
    %c0_20 = arith.constant 0 : index
    %c0_21 = arith.constant 0 : index
    %c0_22 = arith.constant 0 : index
    %29 = vector.load %arg9[%c0_20, %c0_21, %c0_22] : memref<1x1x256xf32, #tpu.memory_space<vmem>>, vector<1x1x256xf32>
    %30 = vector.shape_cast %29 : vector<1x1x256xf32> to vector<1x256xf32>
    %31 = vector.shape_cast %28 : vector<1x256xf32> to vector<1x1x256xf32>
    tpu.vector_store %arg9[%c0_20, %c0_21, %c0_22], %31 {strides = array<i32>} : memref<1x1x256xf32, #tpu.memory_space<vmem>>, vector<1x1x256xf32>,
    return
  }
  func.func @transform_0(%arg0: i32, %arg1: i32) -> (i32, i32, i32) {
    %c0_i32 = arith.constant 0 : i32
    %c0_i32_0 = arith.constant 0 : i32
    return %arg0, %c0_i32, %arg1 : i32, i32, i32
  }
  func.func @transform_1(%arg0: i32, %arg1: i32) -> (i32, i32) {
    %c0_i32 = arith.constant 0 : i32
    %c0_i32_0 = arith.constant 0 : i32
    %c0_i32_1 = arith.constant 0 : i32
    return %c0_i32, %c0_i32_0 : i32, i32
  }
  func.func @transform_2(%arg0: i32, %arg1: i32) -> (i32, i32) {
    %c0_i32 = arith.constant 0 : i32
    %c0_i32_0 = arith.constant 0 : i32
    %c0_i32_1 = arith.constant 0 : i32
    return %c0_i32, %c0_i32_0 : i32, i32
  }
  func.func @transform_3(%arg0: i32, %arg1: i32) -> (i32, i32) {
    %c0_i32 = arith.constant 0 : i32
    %c0_i32_0 = arith.constant 0 : i32
    %c0_i32_1 = arith.constant 0 : i32
    return %c0_i32, %c0_i32_0 : i32, i32
  }
  func.func @transform_4(%arg0: i32, %arg1: i32) -> (i32, i32) {
    %c0_i32 = arith.constant 0 : i32
    %c0_i32_0 = arith.constant 0 : i32
    %c0_i32_1 = arith.constant 0 : i32
    return %c0_i32, %c0_i32_0 : i32, i32
  }
  func.func @transform_5(%arg0: i32, %arg1: i32) -> (i32, i32) {
    %c0_i32 = arith.constant 0 : i32
    %c0_i32_0 = arith.constant 0 : i32
    %c0_i32_1 = arith.constant 0 : i32
    return %c0_i32, %c0_i32_0 : i32, i32
  }
  func.func @transform_6(%arg0: i32, %arg1: i32) -> (i32, i32) {
    %c0_i32 = arith.constant 0 : i32
    %c0_i32_0 = arith.constant 0 : i32
    %c0_i32_1 = arith.constant 0 : i32
    return %c0_i32, %c0_i32_0 : i32, i32
  }
  func.func @transform_7(%arg0: i32, %arg1: i32) -> (i32, i32, i32) {
    %c0_i32 = arith.constant 0 : i32
    %c0_i32_0 = arith.constant 0 : i32
    return %arg0, %c0_i32, %arg1 : i32, i32, i32
  }
}

</mosaic_0001>

<llo_original>
// kernel: pixel_discriminator.2
$region0: #{pixel_discriminator.2}
  #allocation0 [shape = 'u32[]', space=smem, size = 0x4, offset = 0x4, fixed_abs, tag = 'smem constant byte address 0x4 - core index']
  #allocation1 [shape = 'u32[144,128]{1,0:T(1,128)}', space=vmem, size = 0x12000, scoped, tag = 'internal scratch']
  %s0 = inlined_call_operand.vmem [shape: bf16[2,8,256], index: 0, kind: input, shape index: {}]
  %s1 = inlined_call_operand.vmem [shape: bf16[64,8], index: 1, kind: input, shape index: {}]
  %s2 = inlined_call_operand.vmem [shape: f32[64,1], index: 2, kind: input, shape index: {}]
  %s3 = inlined_call_operand.vmem [shape: bf16[128,64], index: 3, kind: input, shape index: {}]
  %s4 = inlined_call_operand.vmem [shape: f32[2,2,128], index: 4, kind: output, shape index: {}]
  %s5 = sld [smem:[#allocation0]]
  $region53: #{pixel_discriminator.2} parent=0
    _
  %s7 = ssub.s32 1, %s5
  %s8 = scalar_select 0, %s7, %s5
  loop: start=0, step=1, limit=4
  $region2: #{pixel_discriminator.2} parent=0 // loop_pre_header
    _
  $region3: #{pixel_discriminator.2} parent=0 // loop_header
    %s10 = sphi 0, %s14
    %p11 = scmp.ge.s32.totalorder %s10, 4
    %s17 = sphi 0, %s29
    %s18 = sphi 0, %s25
    %s19 = sphi 0, %s17
    %s20 = sphi 0, %s18
    %s21 = sphi 0, %s19
    %s22 = sphi 0, %s20
    %s34 = sphi 0, %s36
    %s37 = sphi 0, %s34
    %s38 = sphi 0, %s37
    %s54 = sphi 0, %s38
    %s58 = sphi 0, %s58
    %s60 = sphi 0, %s58
    %s61 = sphi 0, %s60
    %s75 = sphi 0, %s61
    %s79 = sphi 0, %s79
    %s81 = sphi 0, %s79
    %s82 = sphi 0, %s81
    %s96 = sphi 0, %s82
    %s100 = sphi 0, %s100
    %s102 = sphi 0, %s100
    %s103 = sphi 0, %s102
    %s117 = sphi 0, %s103
    %s123 = sphi 0, %s125
    %s126 = sphi 0, %s123
    %s127 = sphi 0, %s126
    %s143 = sphi 0, %s127
  $region4: #{pixel_discriminator.2} parent=0 // loop_header_branch
    %13 = sbr.rel (%p11) target = $region8
  $region5: #{pixel_discriminator.2} parent=0 // loop_body
    %s15 = ssub.s32 %s10, 1
    %s16 = ssub.s32 %s10, 2
    %s23 = sadd.s32 1, %s18
    %p24 = scmp.ge.s32.totalorder %s23, 1
    %s25 = scalar_select %p24, 0, %s23
    %s26 = sadd.s32 1, %s17
    %s27 = scalar_select %p24, %s26, %s17
    %p28 = scmp.ge.s32.totalorder %s27, 2
    %s29 = scalar_select %p28, 0, %s27
    %s30 = ssub.s32 %s17, %s29
    %s31 = ssub.s32 %s18, %s25
    %s32 = sor.u32 %s30, %s31
    %p33 = scmp.eq.s32.totalorder %s32, 0
    %s35 = sadd.s32 %s34, 1
    %s36 = scalar_select %p33, %s34, %s35
    %p39 = pneg %p33
    %p40 = scmp.eq.s32.totalorder %s10, 1
    %p41 = por %p39, %p40
    %p42 = scmp.ne.s32.totalorder %s34, %s37
    %p43 = scmp.eq.s32.totalorder %s10, 0
    %p44 = por %p42, %p43
    %p45 = scmp.ne.s32.totalorder %s34, %s37
    %p46 = scmp.eq.s32.totalorder %s15, 1
    %p47 = por %p45, %p46
    %p48 = scmp.ne.s32.totalorder %s37, %s38
    %p49 = scmp.eq.s32.totalorder %s15, 0
    %p50 = por %p48, %p49
    %p51 = scmp.ne.s32.totalorder %s37, %s38
    %p52 = scmp.eq.s32.totalorder %s16, 1
    %p53 = por %p51, %p52
    %p55 = scmp.ne.s32.totalorder %s38, %s54
    %p56 = scmp.eq.s32.totalorder %s16, 0
    %p57 = por %p55, %p56
    %s59 = sadd.s32 %s58, 1
    %p62 = scmp.eq.s32.totalorder %s10, 1
    %p63 = scmp.ne.s32.totalorder %s58, %s60
    %p64 = scmp.eq.s32.totalorder %s10, 0
    %p65 = por %p63, %p64
    %p66 = scmp.ne.s32.totalorder %s58, %s60
    %p67 = scmp.eq.s32.totalorder %s15, 1
    %p68 = por %p66, %p67
    %p69 = scmp.ne.s32.totalorder %s60, %s61
    %p70 = scmp.eq.s32.totalorder %s15, 0
    %p71 = por %p69, %p70
    %p72 = scmp.ne.s32.totalorder %s60, %s61
    %p73 = scmp.eq.s32.totalorder %s16, 1
    %p74 = por %p72, %p73
    %p76 = scmp.ne.s32.totalorder %s61, %s75
    %p77 = scmp.eq.s32.totalorder %s16, 0
    %p78 = por %p76, %p77
    %s80 = sadd.s32 %s79, 1
    %p83 = scmp.eq.s32.totalorder %s10, 1
    %p84 = scmp.ne.s32.totalorder %s79, %s81
    %p85 = scmp.eq.s32.totalorder %s10, 0
    %p86 = por %p84, %p85
    %p87 = scmp.ne.s32.totalorder %s79, %s81
    %p88 = scmp.eq.s32.totalorder %s15, 1
    %p89 = por %p87, %p88
    %p90 = scmp.ne.s32.totalorder %s81, %s82
    %p91 = scmp.eq.s32.totalorder %s15, 0
    %p92 = por %p90, %p91
    %p93 = scmp.ne.s32.totalorder %s81, %s82
    %p94 = scmp.eq.s32.totalorder %s16, 1
    %p95 = por %p93, %p94
    %p97 = scmp.ne.s32.totalorder %s82, %s96
    %p98 = scmp.eq.s32.totalorder %s16, 0
    %p99 = por %p97, %p98
    %s101 = sadd.s32 %s100, 1
    %p104 = scmp.eq.s32.totalorder %s10, 1
    %p105 = scmp.ne.s32.totalorder %s100, %s102
    %p106 = scmp.eq.s32.totalorder %s10, 0
    %p107 = por %p105, %p106
    %p108 = scmp.ne.s32.totalorder %s100, %s102
    %p109 = scmp.eq.s32.totalorder %s15, 1
    %p110 = por %p108, %p109
    %p111 = scmp.ne.s32.totalorder %s102, %s103
    %p112 = scmp.eq.s32.totalorder %s15, 0
    %p113 = por %p111, %p112
    %p114 = scmp.ne.s32.totalorder %s102, %s103
    %p115 = scmp.eq.s32.totalorder %s16, 1
    %p116 = por %p114, %p115
    %p118 = scmp.ne.s32.totalorder %s103, %s117
    %p119 = scmp.eq.s32.totalorder %s16, 0
    %p120 = por %p118, %p119
    %s121 = ssub.s32 %s17, %s29
    %p122 = scmp.eq.s32.totalorder %s121, 0
    %s124 = sadd.s32 %s123, 1
    %s125 = scalar_select %p122, %s123, %s124
    %p128 = pneg %p122
    %p129 = scmp.eq.s32.totalorder %s10, 1
    %p130 = por %p128, %p129
    %p131 = scmp.ne.s32.totalorder %s123, %s126
    %p132 = scmp.eq.s32.totalorder %s10, 0
    %p133 = por %p131, %p132
    %p134 = scmp.ne.s32.totalorder %s123, %s126
    %p135 = scmp.eq.s32.totalorder %s15, 1
    %p136 = por %p134, %p135
    %p137 = scmp.ne.s32.totalorder %s126, %s127
    %p138 = scmp.eq.s32.totalorder %s15, 0
    %p139 = por %p137, %p138
    %p140 = scmp.ne.s32.totalorder %s126, %s127
    %p141 = scmp.eq.s32.totalorder %s16, 1
    %p142 = por %p140, %p141
    %p144 = scmp.ne.s32.totalorder %s127, %s143
    %p145 = scmp.eq.s32.totalorder %s16, 0
    %p146 = por %p144, %p145
    %p147 = scmp.le.s32.totalorder 1, %s10
    %p148 = scmp.lt.s32.totalorder %s10, 3
    %p149 = pnand %p147, %p148
    %p150 = pneg %p149
    // Predicated region
    $region9: #{pixel_discriminator.2} parent=5 // pred_check
      _
    $region10: #{pixel_discriminator.2} parent=5 // pred_check_branch
      %152 = sbr.rel (%p149) target = $region12
    $region11: #{pixel_discriminator.2} parent=5 // pred_region
      %s153 = ssub.s32 %s10, 1
      // Predicated region
      $region13: #{pixel_discriminator.2} parent=11 // pred_check
        %p154 = pneg %p71
      $region14: #{pixel_discriminator.2} parent=11 // pred_check_branch
        %156 = sbr.rel (%p154) target = $region16
      $region15: #{pixel_discriminator.2} parent=11 // pred_region
        _
      $region16: #{pixel_discriminator.2} parent=11 // pred_fallthru
        _
      // Predicated region
      $region17: #{pixel_discriminator.2} parent=11 // pred_check
        %p157 = pneg %p92
      $region18: #{pixel_discriminator.2} parent=11 // pred_check_branch
        %159 = sbr.rel (%p157) target = $region20
      $region19: #{pixel_discriminator.2} parent=11 // pred_region
        _
      $region20: #{pixel_discriminator.2} parent=11 // pred_fallthru
        _
      // Predicated region
      $region21: #{pixel_discriminator.2} parent=11 // pred_check
        %p160 = pneg %p113
      $region22: #{pixel_discriminator.2} parent=11 // pred_check_branch
        %162 = sbr.rel (%p160) target = $region24
      $region23: #{pixel_discriminator.2} parent=11 // pred_region
        _
      $region24: #{pixel_discriminator.2} parent=11 // pred_fallthru
        _
    $region12: #{pixel_discriminator.2} parent=5 // pred_fallthru
      _
    %p163 = scmp.lt.s32.totalorder %s10, 2
    // Predicated region
    $region25: #{pixel_discriminator.2} parent=5 // pred_check
      %p164 = pneg %p163
    $region26: #{pixel_discriminator.2} parent=5 // pred_check_branch
      %166 = sbr.rel (%p164) target = $region28
    $region27: #{pixel_discriminator.2} parent=5 // pred_region
      // Predicated region
      $region29: #{pixel_discriminator.2} parent=27 // pred_check
        %p167 = pneg %p44
      $region30: #{pixel_discriminator.2} parent=27 // pred_check_branch
        %169 = sbr.rel (%p167) target = $region32
      $region31: #{pixel_discriminator.2} parent=27 // pred_region
        %s170 = smul.u32 2, %s18
        %p171 = scmp.lt.s32.totalorder %s17, 1
        %s172 = scalar_select %p171, %s17, 1
        %p173 = scmp.lt.s32.totalorder %s170, 1
        %s174 = scalar_select %p173, %s170, 1
        %s175 = smul.addr %s172, 2
        %s176 = sadd.s32 %s174, %s175
        %s177 = smul.addr %s176, 4
        %s178 = scalar_lea.vmem %s0, %s177
        %s179 = smul.u32 2, %s18
      $region32: #{pixel_discriminator.2} parent=27 // pred_fallthru
        _
    $region28: #{pixel_discriminator.2} parent=5 // pred_fallthru
      _
    %p180 = scmp.le.s32.totalorder 1, %s10
    %p181 = scmp.lt.s32.totalorder %s10, 3
    %p182 = pnand %p180, %p181
    %p183 = pneg %p182
    // Predicated region
    $region33: #{pixel_discriminator.2} parent=5 // pred_check
      _
    $region34: #{pixel_discriminator.2} parent=5 // pred_check_branch
      %185 = sbr.rel (%p182) target = $region36
    $region35: #{pixel_discriminator.2} parent=5 // pred_region
      %s186 = ssub.s32 %s10, 1
      %s187 = smul.u32 2, %s20
      %p188 = scmp.lt.s32.totalorder %s19, 1
      %s189 = scalar_select %p188, %s19, 1
      %p190 = scmp.lt.s32.totalorder %s187, 1
      %s191 = scalar_select %p190, %s187, 1
      %s192 = smul.addr %s189, 2
      %s193 = sadd.s32 %s191, %s192
      %s194 = smul.addr %s193, 4
      %s195 = scalar_lea.vmem %s0, %s194
      %p196 = pneg %p50
      %p197 = pneg %p47
      %p198 = pneg %p71
      %p199 = pneg %p68
      %p200 = pneg %p92
      %p201 = pneg %p89
      %p202 = pneg %p113
      %p203 = pneg %p110
      %p204 = pneg %p139
      %p205 = pneg %p136
      %p206 = scmp.lt.s32.totalorder %s19, 1
      %s207 = scalar_select %p206, %s19, 1
      %s208 = smul.addr %s207, 2
      %s209 = scalar_lea.vmem %s4, %s208
      %s210 = smul.u32 2, %s20
      %p211 = scmp.lt.s32.totalorder %s19, 1
      %s212 = scalar_select %p211, %s19, 1
      %p213 = scmp.lt.s32.totalorder %s210, 1
      %s214 = scalar_select %p213, %s210, 1
      %s215 = smul.addr %s212, 2
      %s216 = sadd.s32 %s214, %s215
      %s217 = smul.addr %s216, 4
      %s218 = scalar_lea.vmem %s0, %s217
      %s219 = smul.u32 2, %s20
      %p220 = scmp.lt.s32.totalorder %s19, 1
      %s221 = scalar_select %p220, %s19, 1
      %s222 = smul.addr %s221, 2
      %s223 = scalar_lea.vmem %s4, %s222
      %p225 = scmp.eq.s32.totalorder %s20, 0
      // Predicated region
      $region37: #{pixel_discriminator.2} parent=35 // pred_check
        %p226 = pneg %p225
      $region38: #{pixel_discriminator.2} parent=35 // pred_check_branch
        %228 = sbr.rel (%p226) target = $region40
      $region39: #{pixel_discriminator.2} parent=35 // pred_region
        %229 = vst [vmem:[%s223] sm:$0x3] 0.0
      $region40: #{pixel_discriminator.2} parent=35 // pred_fallthru
        _
      %v230 = vld [vmem:[%s218] sm:$0xff]
      %v231 = vld [vmem:[%s1] sm:$0xf]
      %v232 = vld [vmem:[%s1 + $0x4] sm:$0xf]
      %v233 = vld [vmem:[%s1 + $0x8] sm:$0xf]
      %v234 = vld [vmem:[%s1 + $0xc] sm:$0xf]
      %v235 = vld [vmem:[%s1 + $0x10] sm:$0xf]
      %v236 = vld [vmem:[%s1 + $0x14] sm:$0xf]
      %v237 = vld [vmem:[%s1 + $0x18] sm:$0xf]
      %v238 = vld [vmem:[%s1 + $0x1c] sm:$0xf]
      %v239 = vld [vmem:[%s2] sm:$0xff]
      %v240 = vld [vmem:[%s2 + $0x8] sm:$0xff]
      %v241 = vld [vmem:[%s2 + $0x10] sm:$0xff]
      %v242 = vld [vmem:[%s2 + $0x18] sm:$0xff]
      %v243 = vld [vmem:[%s2 + $0x20] sm:$0xff]
      %v244 = vld [vmem:[%s2 + $0x28] sm:$0xff]
      %v245 = vld [vmem:[%s2 + $0x30] sm:$0xff]
      %v246 = vld [vmem:[%s2 + $0x38] sm:$0xff]
      %248 = vset.pattern.permute.xlu0 0
      %249 = vperm.xlu0 %248, %v239
      %v250 = vpop.permute.xlu0 %249
      %253 = vset.pattern.permute.xlu0 0
      %254 = vperm.xlu0 %253, %v240
      %v255 = vpop.permute.xlu0 %254
      %258 = vset.pattern.permute.xlu0 0
      %259 = vperm.xlu0 %258, %v241
      %v260 = vpop.permute.xlu0 %259
      %263 = vset.pattern.permute.xlu0 0
      %264 = vperm.xlu0 %263, %v242
      %v265 = vpop.permute.xlu0 %264
      %268 = vset.pattern.permute.xlu0 0
      %269 = vperm.xlu0 %268, %v243
      %v270 = vpop.permute.xlu0 %269
      %273 = vset.pattern.permute.xlu0 0
      %274 = vperm.xlu0 %273, %v244
      %v275 = vpop.permute.xlu0 %274
      %278 = vset.pattern.permute.xlu0 0
      %279 = vperm.xlu0 %278, %v245
      %v280 = vpop.permute.xlu0 %279
      %283 = vset.pattern.permute.xlu0 0
      %284 = vperm.xlu0 %283, %v246
      %v285 = vpop.permute.xlu0 %284
      %v295 = vunpack.c.l.b16 %v231
      %v296 = vunpack.c.l.b16 %v232
      %v297 = vunpack.c.l.b16 %v233
      %v298 = vunpack.c.l.b16 %v234
      %v299 = vunpack.c.l.b16 %v235
      %v300 = vunpack.c.l.b16 %v236
      %v301 = vunpack.c.l.b16 %v237
      %v302 = vunpack.c.l.b16 %v238
      %v303 = vpack.c.b16 %v296, %v295
      %v304 = vpack.c.b16 %v298, %v297
      %v305 = vpack.c.b16 %v300, %v299
      %v306 = vpack.c.b16 %v302, %v301
      %v308 = vunpack.c.l.b16 %v230
      %v309 = vunpack.c.h.b16 %v230
      %v310 = vpack.c.b16 %v308, %v308
      %v311 = vpack.c.b16 %v309, %v309
      %vm312 = vcmask 64512
      %v314 = vsel %vm312, %v303, 0
      %v317 = vsel %vm312, %v304, 0
      %v320 = vsel %vm312, %v305, 0
      %v323 = vsel %vm312, %v306, 0
      %vm325 = vcmask 1043456
      %v327 = vsel %vm325, %v310, 0
      %v330 = vsel %vm325, %v311, 0
      %332 = vmatprep.subr.bf16.mxu0 %v330
      %333 = vmatpush1.bf16.msra.mxu0 %v327
      %334 = vmatprep.subr.bf16.mxu0 0
      %335 = vmatpush1.bf16.msra.mxu0 0
      %336 = vmatprep.subr.bf16.mxu0 0
      %337 = vmatpush1.bf16.msra.mxu0 0
      %338 = vmatprep.subr.bf16.mxu0 0
      %339 = vmatpush1.bf16.msra.mxu0 0
      %340 = vmatprep.subr.bf16.mxu0 0
      %341 = vmatpush1.bf16.msra.mxu0 0
      %342 = vmatprep.subr.bf16.mxu0 0
      %343 = vmatpush1.bf16.msra.mxu0 0
      %344 = vmatprep.subr.bf16.mxu0 0
      %345 = vmatpush1.bf16.msra.mxu0 0
      %346 = vmatprep.subr.bf16.mxu0 0
      %347 = vmatpush1.bf16.msra.mxu0 0
      %348 = vmatprep.subr.bf16.mxu0 0
      %349 = vmatpush1.bf16.msra.mxu0 0
      %350 = vmatprep.subr.bf16.mxu0 0
      %351 = vmatpush1.bf16.msra.mxu0 0
      %352 = vmatprep.subr.bf16.mxu0 0
      %353 = vmatpush1.bf16.msra.mxu0 0
      %354 = vmatprep.subr.bf16.mxu0 0
      %355 = vmatpush1.bf16.msra.mxu0 0
      %356 = vmatprep.subr.bf16.mxu0 0
      %357 = vmatpush1.bf16.msra.mxu0 0
      %358 = vmatprep.subr.bf16.mxu0 0
      %359 = vmatpush1.bf16.msra.mxu0 0
      %360 = vmatprep.subr.bf16.mxu0 0
      %361 = vmatpush1.bf16.msra.mxu0 0
      %362 = vmatprep.subr.bf16.mxu0 0
      %363 = vmatpush1.bf16.msra.mxu0 0
      %364 = vmatprep.mubr.bf16.mxu0 0
      %365 = vmatmul.mubr.bf16.gmra.mrb[0].mxu0 %v314
      %v366 = vpop.f32.mrb[0].mxu0
      %v367 = vadd.f32 %v250, %v366
      %v368 = vpop.f32.mrb[0].mxu0
      %v369 = vadd.f32 %v250, %v368
      %v370 = vpop.f32.mrb[0].mxu0
      %v371 = vadd.f32 %v255, %v370
      %v372 = vpop.f32.mrb[0].mxu0
      %v373 = vadd.f32 %v255, %v372
      %374 = vmatprep.mubr.bf16.mxu0 0
      %375 = vmatmul.mubr.bf16.gmra.mrb[0].mxu0 %v317
      %v376 = vpop.f32.mrb[0].mxu0
      %v377 = vadd.f32 %v260, %v376
      %v378 = vpop.f32.mrb[0].mxu0
      %v379 = vadd.f32 %v260, %v378
      %v380 = vpop.f32.mrb[0].mxu0
      %v381 = vadd.f32 %v265, %v380
      %v382 = vpop.f32.mrb[0].mxu0
      %v383 = vadd.f32 %v265, %v382
      %384 = vmatprep.mubr.bf16.mxu0 0
      %385 = vmatmul.mubr.bf16.gmra.mrb[0].mxu0 %v320
      %v386 = vpop.f32.mrb[0].mxu0
      %v387 = vadd.f32 %v270, %v386
      %v388 = vpop.f32.mrb[0].mxu0
      %v389 = vadd.f32 %v270, %v388
      %v390 = vpop.f32.mrb[0].mxu0
      %v391 = vadd.f32 %v275, %v390
      %v392 = vpop.f32.mrb[0].mxu0
      %v393 = vadd.f32 %v275, %v392
      %394 = vmatprep.mubr.bf16.mxu0 0
      %395 = vmatmul.mubr.bf16.gmra.mrb[0].mxu0 %v323
      %v396 = vpop.f32.mrb[0].mxu0
      %v397 = vadd.f32 %v280, %v396
      %v398 = vpop.f32.mrb[0].mxu0
      %v399 = vadd.f32 %v280, %v398
      %v400 = vpop.f32.mrb[0].mxu0
      %v401 = vadd.f32 %v285, %v400
      %v402 = vpop.f32.mrb[0].mxu0
      %v403 = vadd.f32 %v285, %v402
      %404 = vdwg.mxu0
      %vm405 = vcmp.gt.f32.partialorder %v367, 0.0
      %vm406 = vcmp.gt.f32.partialorder %v369, 0.0
      %vm407 = vcmp.gt.f32.partialorder %v371, 0.0
      %vm408 = vcmp.gt.f32.partialorder %v373, 0.0
      %vm409 = vcmp.gt.f32.partialorder %v377, 0.0
      %vm410 = vcmp.gt.f32.partialorder %v379, 0.0
      %vm411 = vcmp.gt.f32.partialorder %v381, 0.0
      %vm412 = vcmp.gt.f32.partialorder %v383, 0.0
      %vm413 = vcmp.gt.f32.partialorder %v387, 0.0
      %vm414 = vcmp.gt.f32.partialorder %v389, 0.0
      %vm415 = vcmp.gt.f32.partialorder %v391, 0.0
      %vm416 = vcmp.gt.f32.partialorder %v393, 0.0
      %vm417 = vcmp.gt.f32.partialorder %v397, 0.0
      %vm418 = vcmp.gt.f32.partialorder %v399, 0.0
      %vm419 = vcmp.gt.f32.partialorder %v401, 0.0
      %vm420 = vcmp.gt.f32.partialorder %v403, 0.0
      %v421 = vmul.f32 %v367, 0.2
      %v422 = vmul.f32 %v369, 0.2
      %v423 = vmul.f32 %v371, 0.2
      %v424 = vmul.f32 %v373, 0.2
      %v425 = vmul.f32 %v377, 0.2
      %v426 = vmul.f32 %v379, 0.2
      %v427 = vmul.f32 %v381, 0.2
      %v428 = vmul.f32 %v383, 0.2
      %v429 = vmul.f32 %v387, 0.2
      %v430 = vmul.f32 %v389, 0.2
      %v431 = vmul.f32 %v391, 0.2
      %v432 = vmul.f32 %v393, 0.2
      %v433 = vmul.f32 %v397, 0.2
      %v434 = vmul.f32 %v399, 0.2
      %v435 = vmul.f32 %v401, 0.2
      %v436 = vmul.f32 %v403, 0.2
      %v437 = vsel %vm405, %v367, %v421
      %v438 = vsel %vm406, %v369, %v422
      %v439 = vsel %vm407, %v371, %v423
      %v440 = vsel %vm408, %v373, %v424
      %v441 = vsel %vm409, %v377, %v425
      %v442 = vsel %vm410, %v379, %v426
      %v443 = vsel %vm411, %v381, %v427
      %v444 = vsel %vm412, %v383, %v428
      %v445 = vsel %vm413, %v387, %v429
      %v446 = vsel %vm414, %v389, %v430
      %v447 = vsel %vm415, %v391, %v431
      %v448 = vsel %vm416, %v393, %v432
      %v449 = vsel %vm417, %v397, %v433
      %v450 = vsel %vm418, %v399, %v434
      %v451 = vsel %vm419, %v401, %v435
      %v452 = vsel %vm420, %v403, %v436
      %v453 = vld [vmem:[%s3] sm:$0xf]
      %v454 = vld [vmem:[%s3 + $0x4] sm:$0xf]
      %v455 = vld [vmem:[%s3 + $0x8] sm:$0xf]
      %v456 = vld [vmem:[%s3 + $0xc] sm:$0xf]
      %v457 = vld [vmem:[%s3 + $0x10] sm:$0xf]
      %v458 = vld [vmem:[%s3 + $0x14] sm:$0xf]
      %v459 = vld [vmem:[%s3 + $0x18] sm:$0xf]
      %v460 = vld [vmem:[%s3 + $0x1c] sm:$0xf]
      %v461 = vld [vmem:[%s3 + $0x20] sm:$0xf]
      %v462 = vld [vmem:[%s3 + $0x24] sm:$0xf]
      %v463 = vld [vmem:[%s3 + $0x28] sm:$0xf]
      %v464 = vld [vmem:[%s3 + $0x2c] sm:$0xf]
      %v465 = vld [vmem:[%s3 + $0x30] sm:$0xf]
      %v466 = vld [vmem:[%s3 + $0x34] sm:$0xf]
      %v467 = vld [vmem:[%s3 + $0x38] sm:$0xf]
      %v468 = vld [vmem:[%s3 + $0x3c] sm:$0xf]
      %v469 = vpack.c.bf16 %v439, %v437
      %v470 = vpack.c.bf16 %v440, %v438
      %v471 = vpack.c.bf16 %v443, %v441
      %v472 = vpack.c.bf16 %v444, %v442
      %v473 = vpack.c.bf16 %v447, %v445
      %v474 = vpack.c.bf16 %v448, %v446
      %v475 = vpack.c.bf16 %v451, %v449
      %v476 = vpack.c.bf16 %v452, %v450
      %v493 = vunpack.c.l.b16 %v453
      %v494 = vunpack.c.l.b16 %v454
      %v495 = vunpack.c.l.b16 %v455
      %v496 = vunpack.c.l.b16 %v456
      %v497 = vunpack.c.l.b16 %v457
      %v498 = vunpack.c.l.b16 %v458
      %v499 = vunpack.c.l.b16 %v459
      %v500 = vunpack.c.l.b16 %v460
      %v501 = vunpack.c.l.b16 %v461
      %v502 = vunpack.c.l.b16 %v462
      %v503 = vunpack.c.l.b16 %v463
      %v504 = vunpack.c.l.b16 %v464
      %v505 = vunpack.c.l.b16 %v465
      %v506 = vunpack.c.l.b16 %v466
      %v507 = vunpack.c.l.b16 %v467
      %v508 = vunpack.c.l.b16 %v468
      %v509 = vpack.c.b16 %v494, %v493
      %v510 = vpack.c.b16 %v496, %v495
      %v511 = vpack.c.b16 %v498, %v497
      %v512 = vpack.c.b16 %v500, %v499
      %v513 = vpack.c.b16 %v502, %v501
      %v514 = vpack.c.b16 %v504, %v503
      %v515 = vpack.c.b16 %v506, %v505
      %v516 = vpack.c.b16 %v508, %v507
      %vm517 = vcmask 523264
      %v519 = vsel %vm517, %v509, 0
      %v522 = vsel %vm517, %v510, 0
      %v525 = vsel %vm517, %v511, 0
      %v528 = vsel %vm517, %v512, 0
      %v531 = vsel %vm517, %v513, 0
      %v534 = vsel %vm517, %v514, 0
      %v537 = vsel %vm517, %v515, 0
      %v540 = vsel %vm517, %v516, 0
      %542 = vmatprep.subr.bf16.mxu0 %v470
      %543 = vmatpush1.bf16.msra.mxu0 %v469
      %544 = vmatprep.subr.bf16.mxu0 %v472
      %545 = vmatpush1.bf16.msra.mxu0 %v471
      %546 = vmatprep.subr.bf16.mxu0 %v474
      %547 = vmatpush1.bf16.msra.mxu0 %v473
      %548 = vmatprep.subr.bf16.mxu0 %v476
      %549 = vmatpush1.bf16.msra.mxu0 %v475
      %550 = vmatprep.subr.bf16.mxu0 0
      %551 = vmatpush1.bf16.msra.mxu0 0
      %552 = vmatprep.subr.bf16.mxu0 0
      %553 = vmatpush1.bf16.msra.mxu0 0
      %554 = vmatprep.subr.bf16.mxu0 0
      %555 = vmatpush1.bf16.msra.mxu0 0
      %556 = vmatprep.subr.bf16.mxu0 0
      %557 = vmatpush1.bf16.msra.mxu0 0
      %558 = vmatprep.subr.bf16.mxu0 0
      %559 = vmatpush1.bf16.msra.mxu0 0
      %560 = vmatprep.subr.bf16.mxu0 0
      %561 = vmatpush1.bf16.msra.mxu0 0
      %562 = vmatprep.subr.bf16.mxu0 0
      %563 = vmatpush1.bf16.msra.mxu0 0
      %564 = vmatprep.subr.bf16.mxu0 0
      %565 = vmatpush1.bf16.msra.mxu0 0
      %566 = vmatprep.subr.bf16.mxu0 0
      %567 = vmatpush1.bf16.msra.mxu0 0
      %568 = vmatprep.subr.bf16.mxu0 0
      %569 = vmatpush1.bf16.msra.mxu0 0
      %570 = vmatprep.subr.bf16.mxu0 0
      %571 = vmatpush1.bf16.msra.mxu0 0
      %572 = vmatprep.subr.bf16.mxu0 0
      %573 = vmatpush1.bf16.msra.mxu0 0
      %574 = vmatprep.mubr.bf16.mxu0 0
      %575 = vmatmul.mubr.bf16.gmra.mrb[0].mxu0 %v519
      %v576 = vpop.f32.mrb[0].mxu0
      %v577 = vadd.f32 0.0, %v576
      %v578 = vpop.f32.mrb[0].mxu0
      %v579 = vadd.f32 0.0, %v578
      %v580 = vpop.f32.mrb[0].mxu0
      %v581 = vadd.f32 0.0, %v580
      %v582 = vpop.f32.mrb[0].mxu0
      %v583 = vadd.f32 0.0, %v582
      %584 = vmatprep.mubr.bf16.mxu0 0
      %585 = vmatmul.mubr.bf16.gmra.mrb[0].mxu0 %v522
      %v586 = vpop.f32.mrb[0].mxu0
      %v587 = vadd.f32 0.0, %v586
      %v588 = vpop.f32.mrb[0].mxu0
      %v589 = vadd.f32 0.0, %v588
      %v590 = vpop.f32.mrb[0].mxu0
      %v591 = vadd.f32 0.0, %v590
      %v592 = vpop.f32.mrb[0].mxu0
      %v593 = vadd.f32 0.0, %v592
      %594 = vmatprep.mubr.bf16.mxu0 0
      %595 = vmatmul.mubr.bf16.gmra.mrb[0].mxu0 %v525
      %v596 = vpop.f32.mrb[0].mxu0
      %v597 = vadd.f32 0.0, %v596
      %v598 = vpop.f32.mrb[0].mxu0
      %v599 = vadd.f32 0.0, %v598
      %v600 = vpop.f32.mrb[0].mxu0
      %v601 = vadd.f32 0.0, %v600
      %v602 = vpop.f32.mrb[0].mxu0
      %v603 = vadd.f32 0.0, %v602
      %604 = vmatprep.mubr.bf16.mxu0 0
      %605 = vmatmul.mubr.bf16.gmra.mrb[0].mxu0 %v528
      %v606 = vpop.f32.mrb[0].mxu0
      %v607 = vadd.f32 0.0, %v606
      %v608 = vpop.f32.mrb[0].mxu0
      %v609 = vadd.f32 0.0, %v608
      %v610 = vpop.f32.mrb[0].mxu0
      %v611 = vadd.f32 0.0, %v610
      %v612 = vpop.f32.mrb[0].mxu0
      %v613 = vadd.f32 0.0, %v612
      %614 = vmatprep.mubr.bf16.mxu0 0
      %615 = vmatmul.mubr.bf16.gmra.mrb[0].mxu0 %v531
      %v616 = vpop.f32.mrb[0].mxu0
      %v617 = vadd.f32 0.0, %v616
      %v618 = vpop.f32.mrb[0].mxu0
      %v619 = vadd.f32 0.0, %v618
      %v620 = vpop.f32.mrb[0].mxu0
      %v621 = vadd.f32 0.0, %v620
      %v622 = vpop.f32.mrb[0].mxu0
      %v623 = vadd.f32 0.0, %v622
      %624 = vmatprep.mubr.bf16.mxu0 0
      %625 = vmatmul.mubr.bf16.gmra.mrb[0].mxu0 %v534
      %v626 = vpop.f32.mrb[0].mxu0
      %v627 = vadd.f32 0.0, %v626
      %v628 = vpop.f32.mrb[0].mxu0
      %v629 = vadd.f32 0.0, %v628
      %v630 = vpop.f32.mrb[0].mxu0
      %v631 = vadd.f32 0.0, %v630
      %v632 = vpop.f32.mrb[0].mxu0
      %v633 = vadd.f32 0.0, %v632
      %634 = vmatprep.mubr.bf16.mxu0 0
      %635 = vmatmul.mubr.bf16.gmra.mrb[0].mxu0 %v537
      %v636 = vpop.f32.mrb[0].mxu0
      %v637 = vadd.f32 0.0, %v636
      %v638 = vpop.f32.mrb[0].mxu0
      %v639 = vadd.f32 0.0, %v638
      %v640 = vpop.f32.mrb[0].mxu0
      %v641 = vadd.f32 0.0, %v640
      %v642 = vpop.f32.mrb[0].mxu0
      %v643 = vadd.f32 0.0, %v642
      %644 = vmatprep.mubr.bf16.mxu0 0
      %645 = vmatmul.mubr.bf16.gmra.mrb[0].mxu0 %v540
      %v646 = vpop.f32.mrb[0].mxu0
      %v647 = vadd.f32 0.0, %v646
      %v648 = vpop.f32.mrb[0].mxu0
      %v649 = vadd.f32 0.0, %v648
      %v650 = vpop.f32.mrb[0].mxu0
      %v651 = vadd.f32 0.0, %v650
      %v652 = vpop.f32.mrb[0].mxu0
      %v653 = vadd.f32 0.0, %v652
      %654 = vdwg.mxu0
      %v655 = vlaneseq
      %v656 = vand.u32 %v655, 127
      %v657 = vadd.s32 %v656, 128
      %s658 = smul.u32 %s20, 256
      %v659 = vstv %s658
      %v660 = vadd.s32 %v659, %v656
      %v661 = vadd.s32 %v659, %v657
      %vm662 = vcmp.lt.s32.totalorder %v660, 256
      %vm663 = vcmp.lt.s32.totalorder %v661, 256
      %v664 = vsel %vm662, %v577, 0.0
      %v665 = vsel %vm663, %v579, 0.0
      %v666 = vsel %vm662, %v581, 0.0
      %v667 = vsel %vm663, %v583, 0.0
      %v668 = vsel %vm662, %v587, 0.0
      %v669 = vsel %vm663, %v589, 0.0
      %v670 = vsel %vm662, %v591, 0.0
      %v671 = vsel %vm663, %v593, 0.0
      %v672 = vsel %vm662, %v597, 0.0
      %v673 = vsel %vm663, %v599, 0.0
      %v674 = vsel %vm662, %v601, 0.0
      %v675 = vsel %vm663, %v603, 0.0
      %v676 = vsel %vm662, %v607, 0.0
      %v677 = vsel %vm663, %v609, 0.0
      %v678 = vsel %vm662, %v611, 0.0
      %v679 = vsel %vm663, %v613, 0.0
      %v680 = vsel %vm662, %v617, 0.0
      %v681 = vsel %vm663, %v619, 0.0
      %v682 = vsel %vm662, %v621, 0.0
      %v683 = vsel %vm663, %v623, 0.0
      %v684 = vsel %vm662, %v627, 0.0
      %v685 = vsel %vm663, %v629, 0.0
      %v686 = vsel %vm662, %v631, 0.0
      %v687 = vsel %vm663, %v633, 0.0
      %v688 = vsel %vm662, %v637, 0.0
      %v689 = vsel %vm663, %v639, 0.0
      %v690 = vsel %vm662, %v641, 0.0
      %v691 = vsel %vm663, %v643, 0.0
      %v692 = vsel %vm662, %v647, 0.0
      %v693 = vsel %vm663, %v649, 0.0
      %v694 = vsel %vm662, %v651, 0.0
      %v695 = vsel %vm663, %v653, 0.0
      %v696 = vadd.f32 %v664, %v665
      %697 = vadd.xlane.f32.xlu0 %v696
      %v698 = vpop.xlane.xlu0 %697
      %v699 = vadd.f32 %v666, %v667
      %700 = vadd.xlane.f32.xlu0 %v699
      %v701 = vpop.xlane.xlu0 %700
      %v702 = vadd.f32 %v668, %v669
      %703 = vadd.xlane.f32.xlu0 %v702
      %v704 = vpop.xlane.xlu0 %703
      %v705 = vadd.f32 %v670, %v671
      %706 = vadd.xlane.f32.xlu0 %v705
      %v707 = vpop.xlane.xlu0 %706
      %v708 = vadd.f32 %v672, %v673
      %709 = vadd.xlane.f32.xlu0 %v708
      %v710 = vpop.xlane.xlu0 %709
      %v711 = vadd.f32 %v674, %v675
      %712 = vadd.xlane.f32.xlu0 %v711
      %v713 = vpop.xlane.xlu0 %712
      %v714 = vadd.f32 %v676, %v677
      %715 = vadd.xlane.f32.xlu0 %v714
      %v716 = vpop.xlane.xlu0 %715
      %v717 = vadd.f32 %v678, %v679
      %718 = vadd.xlane.f32.xlu0 %v717
      %v719 = vpop.xlane.xlu0 %718
      %v720 = vadd.f32 %v680, %v681
      %721 = vadd.xlane.f32.xlu0 %v720
      %v722 = vpop.xlane.xlu0 %721
      %v723 = vadd.f32 %v682, %v683
      %724 = vadd.xlane.f32.xlu0 %v723
      %v725 = vpop.xlane.xlu0 %724
      %v726 = vadd.f32 %v684, %v685
      %727 = vadd.xlane.f32.xlu0 %v726
      %v728 = vpop.xlane.xlu0 %727
      %v729 = vadd.f32 %v686, %v687
      %730 = vadd.xlane.f32.xlu0 %v729
      %v731 = vpop.xlane.xlu0 %730
      %v732 = vadd.f32 %v688, %v689
      %733 = vadd.xlane.f32.xlu0 %v732
      %v734 = vpop.xlane.xlu0 %733
      %v735 = vadd.f32 %v690, %v691
      %736 = vadd.xlane.f32.xlu0 %v735
      %v737 = vpop.xlane.xlu0 %736
      %v738 = vadd.f32 %v692, %v693
      %739 = vadd.xlane.f32.xlu0 %v738
      %v740 = vpop.xlane.xlu0 %739
      %v741 = vadd.f32 %v694, %v695
      %742 = vadd.xlane.f32.xlu0 %v741
      %v743 = vpop.xlane.xlu0 %742
      %v744 = vmul.f32 %v664, %v664
      %v745 = vmul.f32 %v665, %v665
      %v746 = vmul.f32 %v666, %v666
      %v747 = vmul.f32 %v667, %v667
      %v748 = vmul.f32 %v668, %v668
      %v749 = vmul.f32 %v669, %v669
      %v750 = vmul.f32 %v670, %v670
      %v751 = vmul.f32 %v671, %v671
      %v752 = vmul.f32 %v672, %v672
      %v753 = vmul.f32 %v673, %v673
      %v754 = vmul.f32 %v674, %v674
      %v755 = vmul.f32 %v675, %v675
      %v756 = vmul.f32 %v676, %v676
      %v757 = vmul.f32 %v677, %v677
      %v758 = vmul.f32 %v678, %v678
      %v759 = vmul.f32 %v679, %v679
      %v760 = vmul.f32 %v680, %v680
      %v761 = vmul.f32 %v681, %v681
      %v762 = vmul.f32 %v682, %v682
      %v763 = vmul.f32 %v683, %v683
      %v764 = vmul.f32 %v684, %v684
      %v765 = vmul.f32 %v685, %v685
      %v766 = vmul.f32 %v686, %v686
      %v767 = vmul.f32 %v687, %v687
      %v768 = vmul.f32 %v688, %v688
      %v769 = vmul.f32 %v689, %v689
      %v770 = vmul.f32 %v690, %v690
      %v771 = vmul.f32 %v691, %v691
      %v772 = vmul.f32 %v692, %v692
      %v773 = vmul.f32 %v693, %v693
      %v774 = vmul.f32 %v694, %v694
      %v775 = vmul.f32 %v695, %v695
      %v776 = vadd.f32 %v744, %v745
      %777 = vadd.xlane.f32.xlu0 %v776
      %v778 = vpop.xlane.xlu0 %777
      %v779 = vadd.f32 %v746, %v747
      %780 = vadd.xlane.f32.xlu0 %v779
      %v781 = vpop.xlane.xlu0 %780
      %v782 = vadd.f32 %v748, %v749
      %783 = vadd.xlane.f32.xlu0 %v782
      %v784 = vpop.xlane.xlu0 %783
      %v785 = vadd.f32 %v750, %v751
      %786 = vadd.xlane.f32.xlu0 %v785
      %v787 = vpop.xlane.xlu0 %786
      %v788 = vadd.f32 %v752, %v753
      %789 = vadd.xlane.f32.xlu0 %v788
      %v790 = vpop.xlane.xlu0 %789
      %v791 = vadd.f32 %v754, %v755
      %792 = vadd.xlane.f32.xlu0 %v791
      %v793 = vpop.xlane.xlu0 %792
      %v794 = vadd.f32 %v756, %v757
      %795 = vadd.xlane.f32.xlu0 %v794
      %v796 = vpop.xlane.xlu0 %795
      %v797 = vadd.f32 %v758, %v759
      %798 = vadd.xlane.f32.xlu0 %v797
      %v799 = vpop.xlane.xlu0 %798
      %v800 = vadd.f32 %v760, %v761
      %801 = vadd.xlane.f32.xlu0 %v800
      %v802 = vpop.xlane.xlu0 %801
      %v803 = vadd.f32 %v762, %v763
      %804 = vadd.xlane.f32.xlu0 %v803
      %v805 = vpop.xlane.xlu0 %804
      %v806 = vadd.f32 %v764, %v765
      %807 = vadd.xlane.f32.xlu0 %v806
      %v808 = vpop.xlane.xlu0 %807
      %v809 = vadd.f32 %v766, %v767
      %810 = vadd.xlane.f32.xlu0 %v809
      %v811 = vpop.xlane.xlu0 %810
      %v812 = vadd.f32 %v768, %v769
      %813 = vadd.xlane.f32.xlu0 %v812
      %v814 = vpop.xlane.xlu0 %813
      %v815 = vadd.f32 %v770, %v771
      %816 = vadd.xlane.f32.xlu0 %v815
      %v817 = vpop.xlane.xlu0 %816
      %v818 = vadd.f32 %v772, %v773
      %819 = vadd.xlane.f32.xlu0 %v818
      %v820 = vpop.xlane.xlu0 %819
      %v821 = vadd.f32 %v774, %v775
      %822 = vadd.xlane.f32.xlu0 %v821
      %v823 = vpop.xlane.xlu0 %822
      %v824 = vld [vmem:[%s223] sm:$0x3]
      %vm825 = vcmask 7168
      %v826 = vsel %vm825, %v698, %v778
      %v827 = vsel %vm825, %v701, %v781
      %v828 = vsel %vm825, %v704, %v784
      %v829 = vsel %vm825, %v707, %v787
      %v830 = vsel %vm825, %v710, %v790
      %v831 = vsel %vm825, %v713, %v793
      %v832 = vsel %vm825, %v716, %v796
      %v833 = vsel %vm825, %v719, %v799
      %v834 = vsel %vm825, %v722, %v802
      %v835 = vsel %vm825, %v725, %v805
      %v836 = vsel %vm825, %v728, %v808
      %v837 = vsel %vm825, %v731, %v811
      %v838 = vsel %vm825, %v734, %v814
      %v839 = vsel %vm825, %v737, %v817
      %v840 = vsel %vm825, %v740, %v820
      %v841 = vsel %vm825, %v743, %v823
      %842 = vxpose.xlu0.b32.start [1/16] %v826, 128
      %843 = vxpose.xlu0.b32.cont [2/16] %v827, 128
      %844 = vxpose.xlu0.b32.cont [3/16] %v828, 128
      %845 = vxpose.xlu0.b32.cont [4/16] %v829, 128
      %846 = vxpose.xlu0.b32.cont [5/16] %v830, 128
      %847 = vxpose.xlu0.b32.cont [6/16] %v831, 128
      %848 = vxpose.xlu0.b32.cont [7/16] %v832, 128
      %849 = vxpose.xlu0.b32.cont [8/16] %v833, 128
      %850 = vxpose.xlu0.b32.cont [9/16] %v834, 128
      %851 = vxpose.xlu0.b32.cont [10/16] %v835, 128
      %852 = vxpose.xlu0.b32.cont [11/16] %v836, 128
      %853 = vxpose.xlu0.b32.cont [12/16] %v837, 128
      %854 = vxpose.xlu0.b32.cont [13/16] %v838, 128
      %855 = vxpose.xlu0.b32.cont [14/16] %v839, 128
      %856 = vxpose.xlu0.b32.cont [15/16] %v840, 128
      %857 = vxpose.xlu0.b32.end [16/16] %v841, 128
      %v858 = vpop.trf.xlu0
      %v859 = vpop.trf.xlu0
      %v860 = vpop.trf.xlu0
      %v861 = vpop.trf.xlu0
      %v862 = vpop.trf.xlu0
      %v863 = vpop.trf.xlu0
      %v864 = vpop.trf.xlu0
      %v865 = vpop.trf.xlu0
      %v866 = vpop.trf.xlu0
      %v867 = vpop.trf.xlu0
      %v868 = vpop.trf.xlu0
      %v869 = vpop.trf.xlu0
      %v870 = vpop.trf.xlu0
      %v871 = vpop.trf.xlu0
      %v872 = vpop.trf.xlu0
      %v873 = vpop.trf.xlu0
      %v874 = vadd.f32 %v824, %v858
      %875 = vst [vmem:[%s223] sm:$0x3] %v874
      %p876 = scmp.lt.s32.totalorder %s19, 1
      %s877 = scalar_select %p876, %s19, 1
      %s878 = smul.addr %s877, 2
      %s879 = scalar_lea.vmem %s4, %s878
      // Predicated region
      $region41: #{pixel_discriminator.2} parent=35 // pred_check
        %p880 = pneg %p136
      $region42: #{pixel_discriminator.2} parent=35 // pred_check_branch
        %882 = sbr.rel (%p880) target = $region44
      $region43: #{pixel_discriminator.2} parent=35 // pred_region
        _
      $region44: #{pixel_discriminator.2} parent=35 // pred_fallthru
        _
    $region36: #{pixel_discriminator.2} parent=5 // pred_fallthru
      _
    %p883 = scmp.le.s32.totalorder 2, %s10
    // Predicated region
    $region45: #{pixel_discriminator.2} parent=5 // pred_check
      %p884 = pneg %p883
    $region46: #{pixel_discriminator.2} parent=5 // pred_check_branch
      %886 = sbr.rel (%p884) target = $region48
    $region47: #{pixel_discriminator.2} parent=5 // pred_region
      %s887 = ssub.s32 %s10, 2
      // Predicated region
      $region49: #{pixel_discriminator.2} parent=47 // pred_check
        %p888 = pneg %p142
      $region50: #{pixel_discriminator.2} parent=47 // pred_check_branch
        %890 = sbr.rel (%p888) target = $region52
      $region51: #{pixel_discriminator.2} parent=47 // pred_region
        %p891 = scmp.lt.s32.totalorder %s21, 1
        %s892 = scalar_select %p891, %s21, 1
        %s893 = smul.addr %s892, 2
        %s894 = scalar_lea.vmem %s4, %s893
      $region52: #{pixel_discriminator.2} parent=47 // pred_fallthru
        _
    $region48: #{pixel_discriminator.2} parent=5 // pred_fallthru
      _
  $region6: #{pixel_discriminator.2} parent=0 // loop_footer
    %s14 = sadd.s32 1, %s10
  $region7: #{pixel_discriminator.2} parent=0 // loop_footer_branch
    %9 = sbr.rel target = $region3
  $region8: #{pixel_discriminator.2} parent=0 // loop_exit
    _

// kernel: pixel_discriminator.3
$region0: #{pixel_discriminator.3}
  #allocation0 [shape = 'u32[]', space=smem, size = 0x4, offset = 0x4, fixed_abs, tag = 'smem constant byte address 0x4 - core index']
  #allocation1 [shape = 'u32[144,128]{1,0:T(1,128)}', space=vmem, size = 0x12000, scoped, tag = 'internal scratch']
  %s0 = inlined_call_operand.vmem [shape: bf16[2,8,256], index: 0, kind: input, shape index: {}]
  %s1 = inlined_call_operand.vmem [shape: bf16[64,8], index: 1, kind: input, shape index: {}]
  %s2 = inlined_call_operand.vmem [shape: f32[64,1], index: 2, kind: input, shape index: {}]
  %s3 = inlined_call_operand.vmem [shape: bf16[128,64], index: 3, kind: input, shape index: {}]
  %s4 = inlined_call_operand.vmem [shape: f32[128,1], index: 4, kind: input, shape index: {}]
  %s5 = inlined_call_operand.vmem [shape: f32[128,1], index: 5, kind: input, shape index: {}]
  %s6 = inlined_call_operand.vmem [shape: bf16[1,128], index: 6, kind: input, shape index: {}]
  %s7 = inlined_call_operand.vmem [shape: f32[2,1,256], index: 7, kind: output, shape index: {}]
  %s8 = sld [smem:[#allocation0]]
  $region61: #{pixel_discriminator.3} parent=0
    _
  %s10 = ssub.s32 1, %s8
  %s11 = scalar_select 0, %s10, %s8
  loop: start=0, step=1, limit=4
  $region2: #{pixel_discriminator.3} parent=0 // loop_pre_header
    _
  $region3: #{pixel_discriminator.3} parent=0 // loop_header
    %s13 = sphi 0, %s17
    %p14 = scmp.ge.s32.totalorder %s13, 4
    %s20 = sphi 0, %s32
    %s21 = sphi 0, %s28
    %s22 = sphi 0, %s20
    %s23 = sphi 0, %s21
    %s24 = sphi 0, %s22
    %s25 = sphi 0, %s23
    %s37 = sphi 0, %s39
    %s40 = sphi 0, %s37
    %s41 = sphi 0, %s40
    %s57 = sphi 0, %s41
    %s61 = sphi 0, %s61
    %s63 = sphi 0, %s61
    %s64 = sphi 0, %s63
    %s78 = sphi 0, %s64
    %s82 = sphi 0, %s82
    %s84 = sphi 0, %s82
    %s85 = sphi 0, %s84
    %s99 = sphi 0, %s85
    %s103 = sphi 0, %s103
    %s105 = sphi 0, %s103
    %s106 = sphi 0, %s105
    %s120 = sphi 0, %s106
    %s124 = sphi 0, %s124
    %s126 = sphi 0, %s124
    %s127 = sphi 0, %s126
    %s141 = sphi 0, %s127
    %s145 = sphi 0, %s145
    %s147 = sphi 0, %s145
    %s148 = sphi 0, %s147
    %s162 = sphi 0, %s148
    %s166 = sphi 0, %s166
    %s168 = sphi 0, %s166
    %s169 = sphi 0, %s168
    %s183 = sphi 0, %s169
    %s191 = sphi 0, %s193
    %s194 = sphi 0, %s191
    %s195 = sphi 0, %s194
    %s211 = sphi 0, %s195
  $region4: #{pixel_discriminator.3} parent=0 // loop_header_branch
    %16 = sbr.rel (%p14) target = $region8
  $region5: #{pixel_discriminator.3} parent=0 // loop_body
    %s18 = ssub.s32 %s13, 1
    %s19 = ssub.s32 %s13, 2
    %s26 = sadd.s32 1, %s21
    %p27 = scmp.ge.s32.totalorder %s26, 1
    %s28 = scalar_select %p27, 0, %s26
    %s29 = sadd.s32 1, %s20
    %s30 = scalar_select %p27, %s29, %s20
    %p31 = scmp.ge.s32.totalorder %s30, 2
    %s32 = scalar_select %p31, 0, %s30
    %s33 = ssub.s32 %s20, %s32
    %s34 = ssub.s32 %s21, %s28
    %s35 = sor.u32 %s33, %s34
    %p36 = scmp.eq.s32.totalorder %s35, 0
    %s38 = sadd.s32 %s37, 1
    %s39 = scalar_select %p36, %s37, %s38
    %p42 = pneg %p36
    %p43 = scmp.eq.s32.totalorder %s13, 1
    %p44 = por %p42, %p43
    %p45 = scmp.ne.s32.totalorder %s37, %s40
    %p46 = scmp.eq.s32.totalorder %s13, 0
    %p47 = por %p45, %p46
    %p48 = scmp.ne.s32.totalorder %s37, %s40
    %p49 = scmp.eq.s32.totalorder %s18, 1
    %p50 = por %p48, %p49
    %p51 = scmp.ne.s32.totalorder %s40, %s41
    %p52 = scmp.eq.s32.totalorder %s18, 0
    %p53 = por %p51, %p52
    %p54 = scmp.ne.s32.totalorder %s40, %s41
    %p55 = scmp.eq.s32.totalorder %s19, 1
    %p56 = por %p54, %p55
    %p58 = scmp.ne.s32.totalorder %s41, %s57
    %p59 = scmp.eq.s32.totalorder %s19, 0
    %p60 = por %p58, %p59
    %s62 = sadd.s32 %s61, 1
    %p65 = scmp.eq.s32.totalorder %s13, 1
    %p66 = scmp.ne.s32.totalorder %s61, %s63
    %p67 = scmp.eq.s32.totalorder %s13, 0
    %p68 = por %p66, %p67
    %p69 = scmp.ne.s32.totalorder %s61, %s63
    %p70 = scmp.eq.s32.totalorder %s18, 1
    %p71 = por %p69, %p70
    %p72 = scmp.ne.s32.totalorder %s63, %s64
    %p73 = scmp.eq.s32.totalorder %s18, 0
    %p74 = por %p72, %p73
    %p75 = scmp.ne.s32.totalorder %s63, %s64
    %p76 = scmp.eq.s32.totalorder %s19, 1
    %p77 = por %p75, %p76
    %p79 = scmp.ne.s32.totalorder %s64, %s78
    %p80 = scmp.eq.s32.totalorder %s19, 0
    %p81 = por %p79, %p80
    %s83 = sadd.s32 %s82, 1
    %p86 = scmp.eq.s32.totalorder %s13, 1
    %p87 = scmp.ne.s32.totalorder %s82, %s84
    %p88 = scmp.eq.s32.totalorder %s13, 0
    %p89 = por %p87, %p88
    %p90 = scmp.ne.s32.totalorder %s82, %s84
    %p91 = scmp.eq.s32.totalorder %s18, 1
    %p92 = por %p90, %p91
    %p93 = scmp.ne.s32.totalorder %s84, %s85
    %p94 = scmp.eq.s32.totalorder %s18, 0
    %p95 = por %p93, %p94
    %p96 = scmp.ne.s32.totalorder %s84, %s85
    %p97 = scmp.eq.s32.totalorder %s19, 1
    %p98 = por %p96, %p97
    %p100 = scmp.ne.s32.totalorder %s85, %s99
    %p101 = scmp.eq.s32.totalorder %s19, 0
    %p102 = por %p100, %p101
    %s104 = sadd.s32 %s103, 1
    %p107 = scmp.eq.s32.totalorder %s13, 1
    %p108 = scmp.ne.s32.totalorder %s103, %s105
    %p109 = scmp.eq.s32.totalorder %s13, 0
    %p110 = por %p108, %p109
    %p111 = scmp.ne.s32.totalorder %s103, %s105
    %p112 = scmp.eq.s32.totalorder %s18, 1
    %p113 = por %p111, %p112
    %p114 = scmp.ne.s32.totalorder %s105, %s106
    %p115 = scmp.eq.s32.totalorder %s18, 0
    %p116 = por %p114, %p115
    %p117 = scmp.ne.s32.totalorder %s105, %s106
    %p118 = scmp.eq.s32.totalorder %s19, 1
    %p119 = por %p117, %p118
    %p121 = scmp.ne.s32.totalorder %s106, %s120
    %p122 = scmp.eq.s32.totalorder %s19, 0
    %p123 = por %p121, %p122
    %s125 = sadd.s32 %s124, 1
    %p128 = scmp.eq.s32.totalorder %s13, 1
    %p129 = scmp.ne.s32.totalorder %s124, %s126
    %p130 = scmp.eq.s32.totalorder %s13, 0
    %p131 = por %p129, %p130
    %p132 = scmp.ne.s32.totalorder %s124, %s126
    %p133 = scmp.eq.s32.totalorder %s18, 1
    %p134 = por %p132, %p133
    %p135 = scmp.ne.s32.totalorder %s126, %s127
    %p136 = scmp.eq.s32.totalorder %s18, 0
    %p137 = por %p135, %p136
    %p138 = scmp.ne.s32.totalorder %s126, %s127
    %p139 = scmp.eq.s32.totalorder %s19, 1
    %p140 = por %p138, %p139
    %p142 = scmp.ne.s32.totalorder %s127, %s141
    %p143 = scmp.eq.s32.totalorder %s19, 0
    %p144 = por %p142, %p143
    %s146 = sadd.s32 %s145, 1
    %p149 = scmp.eq.s32.totalorder %s13, 1
    %p150 = scmp.ne.s32.totalorder %s145, %s147
    %p151 = scmp.eq.s32.totalorder %s13, 0
    %p152 = por %p150, %p151
    %p153 = scmp.ne.s32.totalorder %s145, %s147
    %p154 = scmp.eq.s32.totalorder %s18, 1
    %p155 = por %p153, %p154
    %p156 = scmp.ne.s32.totalorder %s147, %s148
    %p157 = scmp.eq.s32.totalorder %s18, 0
    %p158 = por %p156, %p157
    %p159 = scmp.ne.s32.totalorder %s147, %s148
    %p160 = scmp.eq.s32.totalorder %s19, 1
    %p161 = por %p159, %p160
    %p163 = scmp.ne.s32.totalorder %s148, %s162
    %p164 = scmp.eq.s32.totalorder %s19, 0
    %p165 = por %p163, %p164
    %s167 = sadd.s32 %s166, 1
    %p170 = scmp.eq.s32.totalorder %s13, 1
    %p171 = scmp.ne.s32.totalorder %s166, %s168
    %p172 = scmp.eq.s32.totalorder %s13, 0
    %p173 = por %p171, %p172
    %p174 = scmp.ne.s32.totalorder %s166, %s168
    %p175 = scmp.eq.s32.totalorder %s18, 1
    %p176 = por %p174, %p175
    %p177 = scmp.ne.s32.totalorder %s168, %s169
    %p178 = scmp.eq.s32.totalorder %s18, 0
    %p179 = por %p177, %p178
    %p180 = scmp.ne.s32.totalorder %s168, %s169
    %p181 = scmp.eq.s32.totalorder %s19, 1
    %p182 = por %p180, %p181
    %p184 = scmp.ne.s32.totalorder %s169, %s183
    %p185 = scmp.eq.s32.totalorder %s19, 0
    %p186 = por %p184, %p185
    %s187 = ssub.s32 %s20, %s32
    %s188 = ssub.s32 %s21, %s28
    %s189 = sor.u32 %s187, %s188
    %p190 = scmp.eq.s32.totalorder %s189, 0
    %s192 = sadd.s32 %s191, 1
    %s193 = scalar_select %p190, %s191, %s192
    %p196 = pneg %p190
    %p197 = scmp.eq.s32.totalorder %s13, 1
    %p198 = por %p196, %p197
    %p199 = scmp.ne.s32.totalorder %s191, %s194
    %p200 = scmp.eq.s32.totalorder %s13, 0
    %p201 = por %p199, %p200
    %p202 = scmp.ne.s32.totalorder %s191, %s194
    %p203 = scmp.eq.s32.totalorder %s18, 1
    %p204 = por %p202, %p203
    %p205 = scmp.ne.s32.totalorder %s194, %s195
    %p206 = scmp.eq.s32.totalorder %s18, 0
    %p207 = por %p205, %p206
    %p208 = scmp.ne.s32.totalorder %s194, %s195
    %p209 = scmp.eq.s32.totalorder %s19, 1
    %p210 = por %p208, %p209
    %p212 = scmp.ne.s32.totalorder %s195, %s211
    %p213 = scmp.eq.s32.totalorder %s19, 0
    %p214 = por %p212, %p213
    %p215 = scmp.le.s32.totalorder 1, %s13
    %p216 = scmp.lt.s32.totalorder %s13, 3
    %p217 = pnand %p215, %p216
    %p218 = pneg %p217
    // Predicated region
    $region9: #{pixel_discriminator.3} parent=5 // pred_check
      _
    $region10: #{pixel_discriminator.3} parent=5 // pred_check_branch
      %220 = sbr.rel (%p217) target = $region12
    $region11: #{pixel_discriminator.3} parent=5 // pred_region
      %s221 = ssub.s32 %s13, 1
      // Predicated region
      $region13: #{pixel_discriminator.3} parent=11 // pred_check
        %p222 = pneg %p74
      $region14: #{pixel_discriminator.3} parent=11 // pred_check_branch
        %224 = sbr.rel (%p222) target = $region16
      $region15: #{pixel_discriminator.3} parent=11 // pred_region
        _
      $region16: #{pixel_discriminator.3} parent=11 // pred_fallthru
        _
      // Predicated region
      $region17: #{pixel_discriminator.3} parent=11 // pred_check
        %p225 = pneg %p95
      $region18: #{pixel_discriminator.3} parent=11 // pred_check_branch
        %227 = sbr.rel (%p225) target = $region20
      $region19: #{pixel_discriminator.3} parent=11 // pred_region
        _
      $region20: #{pixel_discriminator.3} parent=11 // pred_fallthru
        _
      // Predicated region
      $region21: #{pixel_discriminator.3} parent=11 // pred_check
        %p228 = pneg %p116
      $region22: #{pixel_discriminator.3} parent=11 // pred_check_branch
        %230 = sbr.rel (%p228) target = $region24
      $region23: #{pixel_discriminator.3} parent=11 // pred_region
        _
      $region24: #{pixel_discriminator.3} parent=11 // pred_fallthru
        _
      // Predicated region
      $region25: #{pixel_discriminator.3} parent=11 // pred_check
        %p231 = pneg %p137
      $region26: #{pixel_discriminator.3} parent=11 // pred_check_branch
        %233 = sbr.rel (%p231) target = $region28
      $region27: #{pixel_discriminator.3} parent=11 // pred_region
        _
      $region28: #{pixel_discriminator.3} parent=11 // pred_fallthru
        _
      // Predicated region
      $region29: #{pixel_discriminator.3} parent=11 // pred_check
        %p234 = pneg %p158
      $region30: #{pixel_discriminator.3} parent=11 // pred_check_branch
        %236 = sbr.rel (%p234) target = $region32
      $region31: #{pixel_discriminator.3} parent=11 // pred_region
        _
      $region32: #{pixel_discriminator.3} parent=11 // pred_fallthru
        _
      // Predicated region
      $region33: #{pixel_discriminator.3} parent=11 // pred_check
        %p237 = pneg %p179
      $region34: #{pixel_discriminator.3} parent=11 // pred_check_branch
        %239 = sbr.rel (%p237) target = $region36
      $region35: #{pixel_discriminator.3} parent=11 // pred_region
        _
      $region36: #{pixel_discriminator.3} parent=11 // pred_fallthru
        _
    $region12: #{pixel_discriminator.3} parent=5 // pred_fallthru
      _
    %p240 = scmp.lt.s32.totalorder %s13, 2
    // Predicated region
    $region37: #{pixel_discriminator.3} parent=5 // pred_check
      %p241 = pneg %p240
    $region38: #{pixel_discriminator.3} parent=5 // pred_check_branch
      %243 = sbr.rel (%p241) target = $region40
    $region39: #{pixel_discriminator.3} parent=5 // pred_region
      // Predicated region
      $region41: #{pixel_discriminator.3} parent=39 // pred_check
        %p244 = pneg %p47
      $region42: #{pixel_discriminator.3} parent=39 // pred_check_branch
        %246 = sbr.rel (%p244) target = $region44
      $region43: #{pixel_discriminator.3} parent=39 // pred_region
        %s247 = smul.u32 2, %s21
        %p248 = scmp.lt.s32.totalorder %s20, 1
        %s249 = scalar_select %p248, %s20, 1
        %p250 = scmp.lt.s32.totalorder %s247, 1
        %s251 = scalar_select %p250, %s247, 1
        %s252 = smul.addr %s249, 2
        %s253 = sadd.s32 %s251, %s252
        %s254 = smul.addr %s253, 4
        %s255 = scalar_lea.vmem %s0, %s254
        %s256 = smul.u32 2, %s21
      $region44: #{pixel_discriminator.3} parent=39 // pred_fallthru
        _
    $region40: #{pixel_discriminator.3} parent=5 // pred_fallthru
      _
    %p257 = scmp.le.s32.totalorder 1, %s13
    %p258 = scmp.lt.s32.totalorder %s13, 3
    %p259 = pnand %p257, %p258
    %p260 = pneg %p259
    // Predicated region
    $region45: #{pixel_discriminator.3} parent=5 // pred_check
      _
    $region46: #{pixel_discriminator.3} parent=5 // pred_check_branch
      %262 = sbr.rel (%p259) target = $region48
    $region47: #{pixel_discriminator.3} parent=5 // pred_region
      %s263 = ssub.s32 %s13, 1
      %s264 = smul.u32 2, %s23
      %p265 = scmp.lt.s32.totalorder %s22, 1
      %s266 = scalar_select %p265, %s22, 1
      %p267 = scmp.lt.s32.totalorder %s264, 1
      %s268 = scalar_select %p267, %s264, 1
      %s269 = smul.addr %s266, 2
      %s270 = sadd.s32 %s268, %s269
      %s271 = smul.addr %s270, 4
      %s272 = scalar_lea.vmem %s0, %s271
      %p273 = pneg %p53
      %p274 = pneg %p50
      %p275 = pneg %p74
      %p276 = pneg %p71
      %p277 = pneg %p95
      %p278 = pneg %p92
      %p279 = pneg %p116
      %p280 = pneg %p113
      %p281 = pneg %p137
      %p282 = pneg %p134
      %p283 = pneg %p158
      %p284 = pneg %p155
      %p285 = pneg %p179
      %p286 = pneg %p176
      %p287 = pneg %p207
      %p288 = pneg %p204
      %s289 = smul.u32 2, %s23
      %p290 = scmp.lt.s32.totalorder %s22, 1
      %s291 = scalar_select %p290, %s22, 1
      %p292 = scmp.lt.s32.totalorder %s289, 1
      %s293 = scalar_select %p292, %s289, 1
      %s294 = smul.addr %s291, 2
      %s295 = sadd.s32 %s293, %s294
      %s296 = scalar_lea.vmem %s7, %s295
      %s297 = smul.u32 2, %s23
      %p298 = scmp.lt.s32.totalorder %s22, 1
      %s299 = scalar_select %p298, %s22, 1
      %p300 = scmp.lt.s32.totalorder %s297, 1
      %s301 = scalar_select %p300, %s297, 1
      %s302 = smul.addr %s299, 2
      %s303 = sadd.s32 %s301, %s302
      %s304 = smul.addr %s303, 4
      %s305 = scalar_lea.vmem %s0, %s304
      %s306 = smul.u32 2, %s23
      %s307 = smul.u32 2, %s23
      %p308 = scmp.lt.s32.totalorder %s22, 1
      %s309 = scalar_select %p308, %s22, 1
      %p310 = scmp.lt.s32.totalorder %s307, 1
      %s311 = scalar_select %p310, %s307, 1
      %s312 = smul.addr %s309, 2
      %s313 = sadd.s32 %s311, %s312
      %s314 = scalar_lea.vmem %s7, %s313
      %s315 = smul.u32 2, %s23
      %v317 = vld [vmem:[%s305] sm:$0xff]
      %v318 = vld [vmem:[%s1] sm:$0xf]
      %v319 = vld [vmem:[%s1 + $0x4] sm:$0xf]
      %v320 = vld [vmem:[%s1 + $0x8] sm:$0xf]
      %v321 = vld [vmem:[%s1 + $0xc] sm:$0xf]
      %v322 = vld [vmem:[%s1 + $0x10] sm:$0xf]
      %v323 = vld [vmem:[%s1 + $0x14] sm:$0xf]
      %v324 = vld [vmem:[%s1 + $0x18] sm:$0xf]
      %v325 = vld [vmem:[%s1 + $0x1c] sm:$0xf]
      %v326 = vld [vmem:[%s2] sm:$0xff]
      %v327 = vld [vmem:[%s2 + $0x8] sm:$0xff]
      %v328 = vld [vmem:[%s2 + $0x10] sm:$0xff]
      %v329 = vld [vmem:[%s2 + $0x18] sm:$0xff]
      %v330 = vld [vmem:[%s2 + $0x20] sm:$0xff]
      %v331 = vld [vmem:[%s2 + $0x28] sm:$0xff]
      %v332 = vld [vmem:[%s2 + $0x30] sm:$0xff]
      %v333 = vld [vmem:[%s2 + $0x38] sm:$0xff]
      %335 = vset.pattern.permute.xlu0 0
      %336 = vperm.xlu0 %335, %v326
      %v337 = vpop.permute.xlu0 %336
      %340 = vset.pattern.permute.xlu0 0
      %341 = vperm.xlu0 %340, %v327
      %v342 = vpop.permute.xlu0 %341
      %345 = vset.pattern.permute.xlu0 0
      %346 = vperm.xlu0 %345, %v328
      %v347 = vpop.permute.xlu0 %346
      %350 = vset.pattern.permute.xlu0 0
      %351 = vperm.xlu0 %350, %v329
      %v352 = vpop.permute.xlu0 %351
      %355 = vset.pattern.permute.xlu0 0
      %356 = vperm.xlu0 %355, %v330
      %v357 = vpop.permute.xlu0 %356
      %360 = vset.pattern.permute.xlu0 0
      %361 = vperm.xlu0 %360, %v331
      %v362 = vpop.permute.xlu0 %361
      %365 = vset.pattern.permute.xlu0 0
      %366 = vperm.xlu0 %365, %v332
      %v367 = vpop.permute.xlu0 %366
      %370 = vset.pattern.permute.xlu0 0
      %371 = vperm.xlu0 %370, %v333
      %v372 = vpop.permute.xlu0 %371
      %v382 = vunpack.c.l.b16 %v318
      %v383 = vunpack.c.l.b16 %v319
      %v384 = vunpack.c.l.b16 %v320
      %v385 = vunpack.c.l.b16 %v321
      %v386 = vunpack.c.l.b16 %v322
      %v387 = vunpack.c.l.b16 %v323
      %v388 = vunpack.c.l.b16 %v324
      %v389 = vunpack.c.l.b16 %v325
      %v390 = vpack.c.b16 %v383, %v382
      %v391 = vpack.c.b16 %v385, %v384
      %v392 = vpack.c.b16 %v387, %v386
      %v393 = vpack.c.b16 %v389, %v388
      %v395 = vunpack.c.l.b16 %v317
      %v396 = vunpack.c.h.b16 %v317
      %v397 = vpack.c.b16 %v395, %v395
      %v398 = vpack.c.b16 %v396, %v396
      %vm399 = vcmask 64512
      %v401 = vsel %vm399, %v390, 0
      %v404 = vsel %vm399, %v391, 0
      %v407 = vsel %vm399, %v392, 0
      %v410 = vsel %vm399, %v393, 0
      %vm412 = vcmask 1043456
      %v414 = vsel %vm412, %v397, 0
      %v417 = vsel %vm412, %v398, 0
      %419 = vmatprep.subr.bf16.mxu0 %v417
      %420 = vmatpush1.bf16.msra.mxu0 %v414
      %421 = vmatprep.subr.bf16.mxu0 0
      %422 = vmatpush1.bf16.msra.mxu0 0
      %423 = vmatprep.subr.bf16.mxu0 0
      %424 = vmatpush1.bf16.msra.mxu0 0
      %425 = vmatprep.subr.bf16.mxu0 0
      %426 = vmatpush1.bf16.msra.mxu0 0
      %427 = vmatprep.subr.bf16.mxu0 0
      %428 = vmatpush1.bf16.msra.mxu0 0
      %429 = vmatprep.subr.bf16.mxu0 0
      %430 = vmatpush1.bf16.msra.mxu0 0
      %431 = vmatprep.subr.bf16.mxu0 0
      %432 = vmatpush1.bf16.msra.mxu0 0
      %433 = vmatprep.subr.bf16.mxu0 0
      %434 = vmatpush1.bf16.msra.mxu0 0
      %435 = vmatprep.subr.bf16.mxu0 0
      %436 = vmatpush1.bf16.msra.mxu0 0
      %437 = vmatprep.subr.bf16.mxu0 0
      %438 = vmatpush1.bf16.msra.mxu0 0
      %439 = vmatprep.subr.bf16.mxu0 0
      %440 = vmatpush1.bf16.msra.mxu0 0
      %441 = vmatprep.subr.bf16.mxu0 0
      %442 = vmatpush1.bf16.msra.mxu0 0
      %443 = vmatprep.subr.bf16.mxu0 0
      %444 = vmatpush1.bf16.msra.mxu0 0
      %445 = vmatprep.subr.bf16.mxu0 0
      %446 = vmatpush1.bf16.msra.mxu0 0
      %447 = vmatprep.subr.bf16.mxu0 0
      %448 = vmatpush1.bf16.msra.mxu0 0
      %449 = vmatprep.subr.bf16.mxu0 0
      %450 = vmatpush1.bf16.msra.mxu0 0
      %451 = vmatprep.mubr.bf16.mxu0 0
      %452 = vmatmul.mubr.bf16.gmra.mrb[0].mxu0 %v401
      %v453 = vpop.f32.mrb[0].mxu0
      %v454 = vadd.f32 %v337, %v453
      %v455 = vpop.f32.mrb[0].mxu0
      %v456 = vadd.f32 %v337, %v455
      %v457 = vpop.f32.mrb[0].mxu0
      %v458 = vadd.f32 %v342, %v457
      %v459 = vpop.f32.mrb[0].mxu0
      %v460 = vadd.f32 %v342, %v459
      %461 = vmatprep.mubr.bf16.mxu0 0
      %462 = vmatmul.mubr.bf16.gmra.mrb[0].mxu0 %v404
      %v463 = vpop.f32.mrb[0].mxu0
      %v464 = vadd.f32 %v347, %v463
      %v465 = vpop.f32.mrb[0].mxu0
      %v466 = vadd.f32 %v347, %v465
      %v467 = vpop.f32.mrb[0].mxu0
      %v468 = vadd.f32 %v352, %v467
      %v469 = vpop.f32.mrb[0].mxu0
      %v470 = vadd.f32 %v352, %v469
      %471 = vmatprep.mubr.bf16.mxu0 0
      %472 = vmatmul.mubr.bf16.gmra.mrb[0].mxu0 %v407
      %v473 = vpop.f32.mrb[0].mxu0
      %v474 = vadd.f32 %v357, %v473
      %v475 = vpop.f32.mrb[0].mxu0
      %v476 = vadd.f32 %v357, %v475
      %v477 = vpop.f32.mrb[0].mxu0
      %v478 = vadd.f32 %v362, %v477
      %v479 = vpop.f32.mrb[0].mxu0
      %v480 = vadd.f32 %v362, %v479
      %481 = vmatprep.mubr.bf16.mxu0 0
      %482 = vmatmul.mubr.bf16.gmra.mrb[0].mxu0 %v410
      %v483 = vpop.f32.mrb[0].mxu0
      %v484 = vadd.f32 %v367, %v483
      %v485 = vpop.f32.mrb[0].mxu0
      %v486 = vadd.f32 %v367, %v485
      %v487 = vpop.f32.mrb[0].mxu0
      %v488 = vadd.f32 %v372, %v487
      %v489 = vpop.f32.mrb[0].mxu0
      %v490 = vadd.f32 %v372, %v489
      %491 = vdwg.mxu0
      %vm492 = vcmp.gt.f32.partialorder %v454, 0.0
      %vm493 = vcmp.gt.f32.partialorder %v456, 0.0
      %vm494 = vcmp.gt.f32.partialorder %v458, 0.0
      %vm495 = vcmp.gt.f32.partialorder %v460, 0.0
      %vm496 = vcmp.gt.f32.partialorder %v464, 0.0
      %vm497 = vcmp.gt.f32.partialorder %v466, 0.0
      %vm498 = vcmp.gt.f32.partialorder %v468, 0.0
      %vm499 = vcmp.gt.f32.partialorder %v470, 0.0
      %vm500 = vcmp.gt.f32.partialorder %v474, 0.0
      %vm501 = vcmp.gt.f32.partialorder %v476, 0.0
      %vm502 = vcmp.gt.f32.partialorder %v478, 0.0
      %vm503 = vcmp.gt.f32.partialorder %v480, 0.0
      %vm504 = vcmp.gt.f32.partialorder %v484, 0.0
      %vm505 = vcmp.gt.f32.partialorder %v486, 0.0
      %vm506 = vcmp.gt.f32.partialorder %v488, 0.0
      %vm507 = vcmp.gt.f32.partialorder %v490, 0.0
      %v508 = vmul.f32 %v454, 0.2
      %v509 = vmul.f32 %v456, 0.2
      %v510 = vmul.f32 %v458, 0.2
      %v511 = vmul.f32 %v460, 0.2
      %v512 = vmul.f32 %v464, 0.2
      %v513 = vmul.f32 %v466, 0.2
      %v514 = vmul.f32 %v468, 0.2
      %v515 = vmul.f32 %v470, 0.2
      %v516 = vmul.f32 %v474, 0.2
      %v517 = vmul.f32 %v476, 0.2
      %v518 = vmul.f32 %v478, 0.2
      %v519 = vmul.f32 %v480, 0.2
      %v520 = vmul.f32 %v484, 0.2
      %v521 = vmul.f32 %v486, 0.2
      %v522 = vmul.f32 %v488, 0.2
      %v523 = vmul.f32 %v490, 0.2
      %v524 = vsel %vm492, %v454, %v508
      %v525 = vsel %vm493, %v456, %v509
      %v526 = vsel %vm494, %v458, %v510
      %v527 = vsel %vm495, %v460, %v511
      %v528 = vsel %vm496, %v464, %v512
      %v529 = vsel %vm497, %v466, %v513
      %v530 = vsel %vm498, %v468, %v514
      %v531 = vsel %vm499, %v470, %v515
      %v532 = vsel %vm500, %v474, %v516
      %v533 = vsel %vm501, %v476, %v517
      %v534 = vsel %vm502, %v478, %v518
      %v535 = vsel %vm503, %v480, %v519
      %v536 = vsel %vm504, %v484, %v520
      %v537 = vsel %vm505, %v486, %v521
      %v538 = vsel %vm506, %v488, %v522
      %v539 = vsel %vm507, %v490, %v523
      %v540 = vld [vmem:[%s3] sm:$0xf]
      %v541 = vld [vmem:[%s3 + $0x4] sm:$0xf]
      %v542 = vld [vmem:[%s3 + $0x8] sm:$0xf]
      %v543 = vld [vmem:[%s3 + $0xc] sm:$0xf]
      %v544 = vld [vmem:[%s3 + $0x10] sm:$0xf]
      %v545 = vld [vmem:[%s3 + $0x14] sm:$0xf]
      %v546 = vld [vmem:[%s3 + $0x18] sm:$0xf]
      %v547 = vld [vmem:[%s3 + $0x1c] sm:$0xf]
      %v548 = vld [vmem:[%s3 + $0x20] sm:$0xf]
      %v549 = vld [vmem:[%s3 + $0x24] sm:$0xf]
      %v550 = vld [vmem:[%s3 + $0x28] sm:$0xf]
      %v551 = vld [vmem:[%s3 + $0x2c] sm:$0xf]
      %v552 = vld [vmem:[%s3 + $0x30] sm:$0xf]
      %v553 = vld [vmem:[%s3 + $0x34] sm:$0xf]
      %v554 = vld [vmem:[%s3 + $0x38] sm:$0xf]
      %v555 = vld [vmem:[%s3 + $0x3c] sm:$0xf]
      %v556 = vpack.c.bf16 %v526, %v524
      %v557 = vpack.c.bf16 %v527, %v525
      %v558 = vpack.c.bf16 %v530, %v528
      %v559 = vpack.c.bf16 %v531, %v529
      %v560 = vpack.c.bf16 %v534, %v532
      %v561 = vpack.c.bf16 %v535, %v533
      %v562 = vpack.c.bf16 %v538, %v536
      %v563 = vpack.c.bf16 %v539, %v537
      %v580 = vunpack.c.l.b16 %v540
      %v581 = vunpack.c.l.b16 %v541
      %v582 = vunpack.c.l.b16 %v542
      %v583 = vunpack.c.l.b16 %v543
      %v584 = vunpack.c.l.b16 %v544
      %v585 = vunpack.c.l.b16 %v545
      %v586 = vunpack.c.l.b16 %v546
      %v587 = vunpack.c.l.b16 %v547
      %v588 = vunpack.c.l.b16 %v548
      %v589 = vunpack.c.l.b16 %v549
      %v590 = vunpack.c.l.b16 %v550
      %v591 = vunpack.c.l.b16 %v551
      %v592 = vunpack.c.l.b16 %v552
      %v593 = vunpack.c.l.b16 %v553
      %v594 = vunpack.c.l.b16 %v554
      %v595 = vunpack.c.l.b16 %v555
      %v596 = vpack.c.b16 %v581, %v580
      %v597 = vpack.c.b16 %v583, %v582
      %v598 = vpack.c.b16 %v585, %v584
      %v599 = vpack.c.b16 %v587, %v586
      %v600 = vpack.c.b16 %v589, %v588
      %v601 = vpack.c.b16 %v591, %v590
      %v602 = vpack.c.b16 %v593, %v592
      %v603 = vpack.c.b16 %v595, %v594
      %vm604 = vcmask 523264
      %v606 = vsel %vm604, %v596, 0
      %v609 = vsel %vm604, %v597, 0
      %v612 = vsel %vm604, %v598, 0
      %v615 = vsel %vm604, %v599, 0
      %v618 = vsel %vm604, %v600, 0
      %v621 = vsel %vm604, %v601, 0
      %v624 = vsel %vm604, %v602, 0
      %v627 = vsel %vm604, %v603, 0
      %629 = vmatprep.subr.bf16.mxu0 %v557
      %630 = vmatpush1.bf16.msra.mxu0 %v556
      %631 = vmatprep.subr.bf16.mxu0 %v559
      %632 = vmatpush1.bf16.msra.mxu0 %v558
      %633 = vmatprep.subr.bf16.mxu0 %v561
      %634 = vmatpush1.bf16.msra.mxu0 %v560
      %635 = vmatprep.subr.bf16.mxu0 %v563
      %636 = vmatpush1.bf16.msra.mxu0 %v562
      %637 = vmatprep.subr.bf16.mxu0 0
      %638 = vmatpush1.bf16.msra.mxu0 0
      %639 = vmatprep.subr.bf16.mxu0 0
      %640 = vmatpush1.bf16.msra.mxu0 0
      %641 = vmatprep.subr.bf16.mxu0 0
      %642 = vmatpush1.bf16.msra.mxu0 0
      %643 = vmatprep.subr.bf16.mxu0 0
      %644 = vmatpush1.bf16.msra.mxu0 0
      %645 = vmatprep.subr.bf16.mxu0 0
      %646 = vmatpush1.bf16.msra.mxu0 0
      %647 = vmatprep.subr.bf16.mxu0 0
      %648 = vmatpush1.bf16.msra.mxu0 0
      %649 = vmatprep.subr.bf16.mxu0 0
      %650 = vmatpush1.bf16.msra.mxu0 0
      %651 = vmatprep.subr.bf16.mxu0 0
      %652 = vmatpush1.bf16.msra.mxu0 0
      %653 = vmatprep.subr.bf16.mxu0 0
      %654 = vmatpush1.bf16.msra.mxu0 0
      %655 = vmatprep.subr.bf16.mxu0 0
      %656 = vmatpush1.bf16.msra.mxu0 0
      %657 = vmatprep.subr.bf16.mxu0 0
      %658 = vmatpush1.bf16.msra.mxu0 0
      %659 = vmatprep.subr.bf16.mxu0 0
      %660 = vmatpush1.bf16.msra.mxu0 0
      %661 = vmatprep.mubr.bf16.mxu0 0
      %662 = vmatmul.mubr.bf16.gmra.mrb[0].mxu0 %v606
      %v663 = vpop.f32.mrb[0].mxu0
      %v664 = vadd.f32 0.0, %v663
      %v665 = vpop.f32.mrb[0].mxu0
      %v666 = vadd.f32 0.0, %v665
      %v667 = vpop.f32.mrb[0].mxu0
      %v668 = vadd.f32 0.0, %v667
      %v669 = vpop.f32.mrb[0].mxu0
      %v670 = vadd.f32 0.0, %v669
      %671 = vmatprep.mubr.bf16.mxu0 0
      %672 = vmatmul.mubr.bf16.gmra.mrb[0].mxu0 %v609
      %v673 = vpop.f32.mrb[0].mxu0
      %v674 = vadd.f32 0.0, %v673
      %v675 = vpop.f32.mrb[0].mxu0
      %v676 = vadd.f32 0.0, %v675
      %v677 = vpop.f32.mrb[0].mxu0
      %v678 = vadd.f32 0.0, %v677
      %v679 = vpop.f32.mrb[0].mxu0
      %v680 = vadd.f32 0.0, %v679
      %681 = vmatprep.mubr.bf16.mxu0 0
      %682 = vmatmul.mubr.bf16.gmra.mrb[0].mxu0 %v612
      %v683 = vpop.f32.mrb[0].mxu0
      %v684 = vadd.f32 0.0, %v683
      %v685 = vpop.f32.mrb[0].mxu0
      %v686 = vadd.f32 0.0, %v685
      %v687 = vpop.f32.mrb[0].mxu0
      %v688 = vadd.f32 0.0, %v687
      %v689 = vpop.f32.mrb[0].mxu0
      %v690 = vadd.f32 0.0, %v689
      %691 = vmatprep.mubr.bf16.mxu0 0
      %692 = vmatmul.mubr.bf16.gmra.mrb[0].mxu0 %v615
      %v693 = vpop.f32.mrb[0].mxu0
      %v694 = vadd.f32 0.0, %v693
      %v695 = vpop.f32.mrb[0].mxu0
      %v696 = vadd.f32 0.0, %v695
      %v697 = vpop.f32.mrb[0].mxu0
      %v698 = vadd.f32 0.0, %v697
      %v699 = vpop.f32.mrb[0].mxu0
      %v700 = vadd.f32 0.0, %v699
      %701 = vmatprep.mubr.bf16.mxu0 0
      %702 = vmatmul.mubr.bf16.gmra.mrb[0].mxu0 %v618
      %v703 = vpop.f32.mrb[0].mxu0
      %v704 = vadd.f32 0.0, %v703
      %v705 = vpop.f32.mrb[0].mxu0
      %v706 = vadd.f32 0.0, %v705
      %v707 = vpop.f32.mrb[0].mxu0
      %v708 = vadd.f32 0.0, %v707
      %v709 = vpop.f32.mrb[0].mxu0
      %v710 = vadd.f32 0.0, %v709
      %711 = vmatprep.mubr.bf16.mxu0 0
      %712 = vmatmul.mubr.bf16.gmra.mrb[0].mxu0 %v621
      %v713 = vpop.f32.mrb[0].mxu0
      %v714 = vadd.f32 0.0, %v713
      %v715 = vpop.f32.mrb[0].mxu0
      %v716 = vadd.f32 0.0, %v715
      %v717 = vpop.f32.mrb[0].mxu0
      %v718 = vadd.f32 0.0, %v717
      %v719 = vpop.f32.mrb[0].mxu0
      %v720 = vadd.f32 0.0, %v719
      %721 = vmatprep.mubr.bf16.mxu0 0
      %722 = vmatmul.mubr.bf16.gmra.mrb[0].mxu0 %v624
      %v723 = vpop.f32.mrb[0].mxu0
      %v724 = vadd.f32 0.0, %v723
      %v725 = vpop.f32.mrb[0].mxu0
      %v726 = vadd.f32 0.0, %v725
      %v727 = vpop.f32.mrb[0].mxu0
      %v728 = vadd.f32 0.0, %v727
      %v729 = vpop.f32.mrb[0].mxu0
      %v730 = vadd.f32 0.0, %v729
      %731 = vmatprep.mubr.bf16.mxu0 0
      %732 = vmatmul.mubr.bf16.gmra.mrb[0].mxu0 %v627
      %v733 = vpop.f32.mrb[0].mxu0
      %v734 = vadd.f32 0.0, %v733
      %v735 = vpop.f32.mrb[0].mxu0
      %v736 = vadd.f32 0.0, %v735
      %v737 = vpop.f32.mrb[0].mxu0
      %v738 = vadd.f32 0.0, %v737
      %v739 = vpop.f32.mrb[0].mxu0
      %v740 = vadd.f32 0.0, %v739
      %741 = vdwg.mxu0
      %v742 = vld [vmem:[%s4] sm:$0xff]
      %v743 = vld [vmem:[%s4 + $0x8] sm:$0xff]
      %v744 = vld [vmem:[%s4 + $0x10] sm:$0xff]
      %v745 = vld [vmem:[%s4 + $0x18] sm:$0xff]
      %v746 = vld [vmem:[%s4 + $0x20] sm:$0xff]
      %v747 = vld [vmem:[%s4 + $0x28] sm:$0xff]
      %v748 = vld [vmem:[%s4 + $0x30] sm:$0xff]
      %v749 = vld [vmem:[%s4 + $0x38] sm:$0xff]
      %v750 = vld [vmem:[%s4 + $0x40] sm:$0xff]
      %v751 = vld [vmem:[%s4 + $0x48] sm:$0xff]
      %v752 = vld [vmem:[%s4 + $0x50] sm:$0xff]
      %v753 = vld [vmem:[%s4 + $0x58] sm:$0xff]
      %v754 = vld [vmem:[%s4 + $0x60] sm:$0xff]
      %v755 = vld [vmem:[%s4 + $0x68] sm:$0xff]
      %v756 = vld [vmem:[%s4 + $0x70] sm:$0xff]
      %v757 = vld [vmem:[%s4 + $0x78] sm:$0xff]
      %759 = vset.pattern.permute.xlu0 0
      %760 = vperm.xlu0 %759, %v742
      %v761 = vpop.permute.xlu0 %760
      %764 = vset.pattern.permute.xlu0 0
      %765 = vperm.xlu0 %764, %v743
      %v766 = vpop.permute.xlu0 %765
      %769 = vset.pattern.permute.xlu0 0
      %770 = vperm.xlu0 %769, %v744
      %v771 = vpop.permute.xlu0 %770
      %774 = vset.pattern.permute.xlu0 0
      %775 = vperm.xlu0 %774, %v745
      %v776 = vpop.permute.xlu0 %775
      %779 = vset.pattern.permute.xlu0 0
      %780 = vperm.xlu0 %779, %v746
      %v781 = vpop.permute.xlu0 %780
      %784 = vset.pattern.permute.xlu0 0
      %785 = vperm.xlu0 %784, %v747
      %v786 = vpop.permute.xlu0 %785
      %789 = vset.pattern.permute.xlu0 0
      %790 = vperm.xlu0 %789, %v748
      %v791 = vpop.permute.xlu0 %790
      %794 = vset.pattern.permute.xlu0 0
      %795 = vperm.xlu0 %794, %v749
      %v796 = vpop.permute.xlu0 %795
      %799 = vset.pattern.permute.xlu0 0
      %800 = vperm.xlu0 %799, %v750
      %v801 = vpop.permute.xlu0 %800
      %804 = vset.pattern.permute.xlu0 0
      %805 = vperm.xlu0 %804, %v751
      %v806 = vpop.permute.xlu0 %805
      %809 = vset.pattern.permute.xlu0 0
      %810 = vperm.xlu0 %809, %v752
      %v811 = vpop.permute.xlu0 %810
      %814 = vset.pattern.permute.xlu0 0
      %815 = vperm.xlu0 %814, %v753
      %v816 = vpop.permute.xlu0 %815
      %819 = vset.pattern.permute.xlu0 0
      %820 = vperm.xlu0 %819, %v754
      %v821 = vpop.permute.xlu0 %820
      %824 = vset.pattern.permute.xlu0 0
      %825 = vperm.xlu0 %824, %v755
      %v826 = vpop.permute.xlu0 %825
      %829 = vset.pattern.permute.xlu0 0
      %830 = vperm.xlu0 %829, %v756
      %v831 = vpop.permute.xlu0 %830
      %834 = vset.pattern.permute.xlu0 0
      %835 = vperm.xlu0 %834, %v757
      %v836 = vpop.permute.xlu0 %835
      %v838 = vmul.f32 %v664, %v761
      %v839 = vmul.f32 %v666, %v761
      %v840 = vmul.f32 %v668, %v766
      %v841 = vmul.f32 %v670, %v766
      %v842 = vmul.f32 %v674, %v771
      %v843 = vmul.f32 %v676, %v771
      %v844 = vmul.f32 %v678, %v776
      %v845 = vmul.f32 %v680, %v776
      %v846 = vmul.f32 %v684, %v781
      %v847 = vmul.f32 %v686, %v781
      %v848 = vmul.f32 %v688, %v786
      %v849 = vmul.f32 %v690, %v786
      %v850 = vmul.f32 %v694, %v791
      %v851 = vmul.f32 %v696, %v791
      %v852 = vmul.f32 %v698, %v796
      %v853 = vmul.f32 %v700, %v796
      %v854 = vmul.f32 %v704, %v801
      %v855 = vmul.f32 %v706, %v801
      %v856 = vmul.f32 %v708, %v806
      %v857 = vmul.f32 %v710, %v806
      %v858 = vmul.f32 %v714, %v811
      %v859 = vmul.f32 %v716, %v811
      %v860 = vmul.f32 %v718, %v816
      %v861 = vmul.f32 %v720, %v816
      %v862 = vmul.f32 %v724, %v821
      %v863 = vmul.f32 %v726, %v821
      %v864 = vmul.f32 %v728, %v826
      %v865 = vmul.f32 %v730, %v826
      %v866 = vmul.f32 %v734, %v831
      %v867 = vmul.f32 %v736, %v831
      %v868 = vmul.f32 %v738, %v836
      %v869 = vmul.f32 %v740, %v836
      %v870 = vld [vmem:[%s5] sm:$0xff]
      %v871 = vld [vmem:[%s5 + $0x8] sm:$0xff]
      %v872 = vld [vmem:[%s5 + $0x10] sm:$0xff]
      %v873 = vld [vmem:[%s5 + $0x18] sm:$0xff]
      %v874 = vld [vmem:[%s5 + $0x20] sm:$0xff]
      %v875 = vld [vmem:[%s5 + $0x28] sm:$0xff]
      %v876 = vld [vmem:[%s5 + $0x30] sm:$0xff]
      %v877 = vld [vmem:[%s5 + $0x38] sm:$0xff]
      %v878 = vld [vmem:[%s5 + $0x40] sm:$0xff]
      %v879 = vld [vmem:[%s5 + $0x48] sm:$0xff]
      %v880 = vld [vmem:[%s5 + $0x50] sm:$0xff]
      %v881 = vld [vmem:[%s5 + $0x58] sm:$0xff]
      %v882 = vld [vmem:[%s5 + $0x60] sm:$0xff]
      %v883 = vld [vmem:[%s5 + $0x68] sm:$0xff]
      %v884 = vld [vmem:[%s5 + $0x70] sm:$0xff]
      %v885 = vld [vmem:[%s5 + $0x78] sm:$0xff]
      %887 = vset.pattern.permute.xlu0 0
      %888 = vperm.xlu0 %887, %v870
      %v889 = vpop.permute.xlu0 %888
      %892 = vset.pattern.permute.xlu0 0
      %893 = vperm.xlu0 %892, %v871
      %v894 = vpop.permute.xlu0 %893
      %897 = vset.pattern.permute.xlu0 0
      %898 = vperm.xlu0 %897, %v872
      %v899 = vpop.permute.xlu0 %898
      %902 = vset.pattern.permute.xlu0 0
      %903 = vperm.xlu0 %902, %v873
      %v904 = vpop.permute.xlu0 %903
      %907 = vset.pattern.permute.xlu0 0
      %908 = vperm.xlu0 %907, %v874
      %v909 = vpop.permute.xlu0 %908
      %912 = vset.pattern.permute.xlu0 0
      %913 = vperm.xlu0 %912, %v875
      %v914 = vpop.permute.xlu0 %913
      %917 = vset.pattern.permute.xlu0 0
      %918 = vperm.xlu0 %917, %v876
      %v919 = vpop.permute.xlu0 %918
      %922 = vset.pattern.permute.xlu0 0
      %923 = vperm.xlu0 %922, %v877
      %v924 = vpop.permute.xlu0 %923
      %927 = vset.pattern.permute.xlu0 0
      %928 = vperm.xlu0 %927, %v878
      %v929 = vpop.permute.xlu0 %928
      %932 = vset.pattern.permute.xlu0 0
      %933 = vperm.xlu0 %932, %v879
      %v934 = vpop.permute.xlu0 %933
      %937 = vset.pattern.permute.xlu0 0
      %938 = vperm.xlu0 %937, %v880
      %v939 = vpop.permute.xlu0 %938
      %942 = vset.pattern.permute.xlu0 0
      %943 = vperm.xlu0 %942, %v881
      %v944 = vpop.permute.xlu0 %943
      %947 = vset.pattern.permute.xlu0 0
      %948 = vperm.xlu0 %947, %v882
      %v949 = vpop.permute.xlu0 %948
      %952 = vset.pattern.permute.xlu0 0
      %953 = vperm.xlu0 %952, %v883
      %v954 = vpop.permute.xlu0 %953
      %957 = vset.pattern.permute.xlu0 0
      %958 = vperm.xlu0 %957, %v884
      %v959 = vpop.permute.xlu0 %958
      %962 = vset.pattern.permute.xlu0 0
      %963 = vperm.xlu0 %962, %v885
      %v964 = vpop.permute.xlu0 %963
      %v966 = vadd.f32 %v838, %v889
      %v967 = vadd.f32 %v839, %v889
      %v968 = vadd.f32 %v840, %v894
      %v969 = vadd.f32 %v841, %v894
      %v970 = vadd.f32 %v842, %v899
      %v971 = vadd.f32 %v843, %v899
      %v972 = vadd.f32 %v844, %v904
      %v973 = vadd.f32 %v845, %v904
      %v974 = vadd.f32 %v846, %v909
      %v975 = vadd.f32 %v847, %v909
      %v976 = vadd.f32 %v848, %v914
      %v977 = vadd.f32 %v849, %v914
      %v978 = vadd.f32 %v850, %v919
      %v979 = vadd.f32 %v851, %v919
      %v980 = vadd.f32 %v852, %v924
      %v981 = vadd.f32 %v853, %v924
      %v982 = vadd.f32 %v854, %v929
      %v983 = vadd.f32 %v855, %v929
      %v984 = vadd.f32 %v856, %v934
      %v985 = vadd.f32 %v857, %v934
      %v986 = vadd.f32 %v858, %v939
      %v987 = vadd.f32 %v859, %v939
      %v988 = vadd.f32 %v860, %v944
      %v989 = vadd.f32 %v861, %v944
      %v990 = vadd.f32 %v862, %v949
      %v991 = vadd.f32 %v863, %v949
      %v992 = vadd.f32 %v864, %v954
      %v993 = vadd.f32 %v865, %v954
      %v994 = vadd.f32 %v866, %v959
      %v995 = vadd.f32 %v867, %v959
      %v996 = vadd.f32 %v868, %v964
      %v997 = vadd.f32 %v869, %v964
      %vm998 = vcmp.gt.f32.partialorder %v966, 0.0
      %vm999 = vcmp.gt.f32.partialorder %v967, 0.0
      %vm1000 = vcmp.gt.f32.partialorder %v968, 0.0
      %vm1001 = vcmp.gt.f32.partialorder %v969, 0.0
      %vm1002 = vcmp.gt.f32.partialorder %v970, 0.0
      %vm1003 = vcmp.gt.f32.partialorder %v971, 0.0
      %vm1004 = vcmp.gt.f32.partialorder %v972, 0.0
      %vm1005 = vcmp.gt.f32.partialorder %v973, 0.0
      %vm1006 = vcmp.gt.f32.partialorder %v974, 0.0
      %vm1007 = vcmp.gt.f32.partialorder %v975, 0.0
      %vm1008 = vcmp.gt.f32.partialorder %v976, 0.0
      %vm1009 = vcmp.gt.f32.partialorder %v977, 0.0
      %vm1010 = vcmp.gt.f32.partialorder %v978, 0.0
      %vm1011 = vcmp.gt.f32.partialorder %v979, 0.0
      %vm1012 = vcmp.gt.f32.partialorder %v980, 0.0
      %vm1013 = vcmp.gt.f32.partialorder %v981, 0.0
      %vm1014 = vcmp.gt.f32.partialorder %v982, 0.0
      %vm1015 = vcmp.gt.f32.partialorder %v983, 0.0
      %vm1016 = vcmp.gt.f32.partialorder %v984, 0.0
      %vm1017 = vcmp.gt.f32.partialorder %v985, 0.0
      %vm1018 = vcmp.gt.f32.partialorder %v986, 0.0
      %vm1019 = vcmp.gt.f32.partialorder %v987, 0.0
      %vm1020 = vcmp.gt.f32.partialorder %v988, 0.0
      %vm1021 = vcmp.gt.f32.partialorder %v989, 0.0
      %vm1022 = vcmp.gt.f32.partialorder %v990, 0.0
      %vm1023 = vcmp.gt.f32.partialorder %v991, 0.0
      %vm1024 = vcmp.gt.f32.partialorder %v992, 0.0
      %vm1025 = vcmp.gt.f32.partialorder %v993, 0.0
      %vm1026 = vcmp.gt.f32.partialorder %v994, 0.0
      %vm1027 = vcmp.gt.f32.partialorder %v995, 0.0
      %vm1028 = vcmp.gt.f32.partialorder %v996, 0.0
      %vm1029 = vcmp.gt.f32.partialorder %v997, 0.0
      %v1030 = vmul.f32 %v966, 0.2
      %v1031 = vmul.f32 %v967, 0.2
      %v1032 = vmul.f32 %v968, 0.2
      %v1033 = vmul.f32 %v969, 0.2
      %v1034 = vmul.f32 %v970, 0.2
      %v1035 = vmul.f32 %v971, 0.2
      %v1036 = vmul.f32 %v972, 0.2
      %v1037 = vmul.f32 %v973, 0.2
      %v1038 = vmul.f32 %v974, 0.2
      %v1039 = vmul.f32 %v975, 0.2
      %v1040 = vmul.f32 %v976, 0.2
      %v1041 = vmul.f32 %v977, 0.2
      %v1042 = vmul.f32 %v978, 0.2
      %v1043 = vmul.f32 %v979, 0.2
      %v1044 = vmul.f32 %v980, 0.2
      %v1045 = vmul.f32 %v981, 0.2
      %v1046 = vmul.f32 %v982, 0.2
      %v1047 = vmul.f32 %v983, 0.2
      %v1048 = vmul.f32 %v984, 0.2
      %v1049 = vmul.f32 %v985, 0.2
      %v1050 = vmul.f32 %v986, 0.2
      %v1051 = vmul.f32 %v987, 0.2
      %v1052 = vmul.f32 %v988, 0.2
      %v1053 = vmul.f32 %v989, 0.2
      %v1054 = vmul.f32 %v990, 0.2
      %v1055 = vmul.f32 %v991, 0.2
      %v1056 = vmul.f32 %v992, 0.2
      %v1057 = vmul.f32 %v993, 0.2
      %v1058 = vmul.f32 %v994, 0.2
      %v1059 = vmul.f32 %v995, 0.2
      %v1060 = vmul.f32 %v996, 0.2
      %v1061 = vmul.f32 %v997, 0.2
      %v1062 = vsel %vm998, %v966, %v1030
      %v1063 = vsel %vm999, %v967, %v1031
      %v1064 = vsel %vm1000, %v968, %v1032
      %v1065 = vsel %vm1001, %v969, %v1033
      %v1066 = vsel %vm1002, %v970, %v1034
      %v1067 = vsel %vm1003, %v971, %v1035
      %v1068 = vsel %vm1004, %v972, %v1036
      %v1069 = vsel %vm1005, %v973, %v1037
      %v1070 = vsel %vm1006, %v974, %v1038
      %v1071 = vsel %vm1007, %v975, %v1039
      %v1072 = vsel %vm1008, %v976, %v1040
      %v1073 = vsel %vm1009, %v977, %v1041
      %v1074 = vsel %vm1010, %v978, %v1042
      %v1075 = vsel %vm1011, %v979, %v1043
      %v1076 = vsel %vm1012, %v980, %v1044
      %v1077 = vsel %vm1013, %v981, %v1045
      %v1078 = vsel %vm1014, %v982, %v1046
      %v1079 = vsel %vm1015, %v983, %v1047
      %v1080 = vsel %vm1016, %v984, %v1048
      %v1081 = vsel %vm1017, %v985, %v1049
      %v1082 = vsel %vm1018, %v986, %v1050
      %v1083 = vsel %vm1019, %v987, %v1051
      %v1084 = vsel %vm1020, %v988, %v1052
      %v1085 = vsel %vm1021, %v989, %v1053
      %v1086 = vsel %vm1022, %v990, %v1054
      %v1087 = vsel %vm1023, %v991, %v1055
      %v1088 = vsel %vm1024, %v992, %v1056
      %v1089 = vsel %vm1025, %v993, %v1057
      %v1090 = vsel %vm1026, %v994, %v1058
      %v1091 = vsel %vm1027, %v995, %v1059
      %v1092 = vsel %vm1028, %v996, %v1060
      %v1093 = vsel %vm1029, %v997, %v1061
      %v1094 = vld [vmem:[%s6] sm:$0x1]
      %v1095 = vpack.c.bf16 %v1064, %v1062
      %v1096 = vpack.c.bf16 %v1065, %v1063
      %v1097 = vpack.c.bf16 %v1068, %v1066
      %v1098 = vpack.c.bf16 %v1069, %v1067
      %v1099 = vpack.c.bf16 %v1072, %v1070
      %v1100 = vpack.c.bf16 %v1073, %v1071
      %v1101 = vpack.c.bf16 %v1076, %v1074
      %v1102 = vpack.c.bf16 %v1077, %v1075
      %v1103 = vpack.c.bf16 %v1080, %v1078
      %v1104 = vpack.c.bf16 %v1081, %v1079
      %v1105 = vpack.c.bf16 %v1084, %v1082
      %v1106 = vpack.c.bf16 %v1085, %v1083
      %v1107 = vpack.c.bf16 %v1088, %v1086
      %v1108 = vpack.c.bf16 %v1089, %v1087
      %v1109 = vpack.c.bf16 %v1092, %v1090
      %v1110 = vpack.c.bf16 %v1093, %v1091
      %1111 = vmatprep.subr.bf16.mxu0 %v1096
      %1112 = vmatpush1.bf16.msra.mxu0 %v1095
      %1113 = vmatprep.subr.bf16.mxu0 %v1098
      %1114 = vmatpush1.bf16.msra.mxu0 %v1097
      %1115 = vmatprep.subr.bf16.mxu0 %v1100
      %1116 = vmatpush1.bf16.msra.mxu0 %v1099
      %1117 = vmatprep.subr.bf16.mxu0 %v1102
      %1118 = vmatpush1.bf16.msra.mxu0 %v1101
      %1119 = vmatprep.subr.bf16.mxu0 %v1104
      %1120 = vmatpush1.bf16.msra.mxu0 %v1103
      %1121 = vmatprep.subr.bf16.mxu0 %v1106
      %1122 = vmatpush1.bf16.msra.mxu0 %v1105
      %1123 = vmatprep.subr.bf16.mxu0 %v1108
      %1124 = vmatpush1.bf16.msra.mxu0 %v1107
      %1125 = vmatprep.subr.bf16.mxu0 %v1110
      %1126 = vmatpush1.bf16.msra.mxu0 %v1109
      %1127 = vmatprep.subr.bf16.mxu0 0
      %1128 = vmatpush1.bf16.msra.mxu0 0
      %1129 = vmatprep.subr.bf16.mxu0 0
      %1130 = vmatpush1.bf16.msra.mxu0 0
      %1131 = vmatprep.subr.bf16.mxu0 0
      %1132 = vmatpush1.bf16.msra.mxu0 0
      %1133 = vmatprep.subr.bf16.mxu0 0
      %1134 = vmatpush1.bf16.msra.mxu0 0
      %1135 = vmatprep.subr.bf16.mxu0 0
      %1136 = vmatpush1.bf16.msra.mxu0 0
      %1137 = vmatprep.subr.bf16.mxu0 0
      %1138 = vmatpush1.bf16.msra.mxu0 0
      %1139 = vmatprep.subr.bf16.mxu0 0
      %1140 = vmatpush1.bf16.msra.mxu0 0
      %1141 = vmatprep.subr.bf16.mxu0 0
      %1142 = vmatpush1.bf16.msra.mxu0 0
      %1143 = vmatprep.mubr.bf16.mxu0 0
      %1144 = vmatmul.mubr.bf16.gmra.mrb[0].mxu0 %v1094
      %v1145 = vpop.f32.mrb[0].mxu0
      %v1146 = vadd.f32 0.0, %v1145
      %v1147 = vpop.f32.mrb[0].mxu0
      %v1148 = vadd.f32 0.0, %v1147
      %v1149 = vpop.f32.mrb[0].mxu0
      %v1150 = vpop.f32.mrb[0].mxu0
      %1151 = vdwg.mxu0
      %v1154 = vcombine.low %v1146, %v1148
      %v1156 = vunpack.c.l.s4 1966171168
      %v1157 = vunpack.c.0.s8 %v1156
      %v1158 = vlaneseq
      %v1159 = vshrl.u32 %v1158, 7
      %v1160 = vsub.s32 %v1157, %v1159
      %v1161 = vrot.slane %v1154, %v1160
      %v1163 = vunpack.c.l.s4 1966171168
      %v1164 = vunpack.c.0.s8 %v1163
      %v1165 = vlaneseq
      %v1166 = vshrl.u32 %v1165, 7
      %v1167 = vsub.s32 %v1164, %v1166
      %v1168 = vrot.slane %v1161, %v1167
      %v1170 = vlaneseq
      %vm1171 = vcmp.ge.s32.totalorder %v1170, 0
      %vm1172 = vcmp.lt.s32.totalorder %v1170, 256
      %vm1173 = vmand %vm1171, %vm1172
      %1174 = vst.msk [vmem:[%s314] sm:$0x3] %vm1173, %v1168
      %s1175 = smul.u32 2, %s23
      %p1176 = scmp.lt.s32.totalorder %s22, 1
      %s1177 = scalar_select %p1176, %s22, 1
      %p1178 = scmp.lt.s32.totalorder %s1175, 1
      %s1179 = scalar_select %p1178, %s1175, 1
      %s1180 = smul.addr %s1177, 2
      %s1181 = sadd.s32 %s1179, %s1180
      %s1182 = scalar_lea.vmem %s7, %s1181
      // Predicated region
      $region49: #{pixel_discriminator.3} parent=47 // pred_check
        %p1183 = pneg %p204
      $region50: #{pixel_discriminator.3} parent=47 // pred_check_branch
        %1185 = sbr.rel (%p1183) target = $region52
      $region51: #{pixel_discriminator.3} parent=47 // pred_region
        %s1186 = smul.u32 2, %s23
      $region52: #{pixel_discriminator.3} parent=47 // pred_fallthru
        _
    $region48: #{pixel_discriminator.3} parent=5 // pred_fallthru
      _
    %p1187 = scmp.le.s32.totalorder 2, %s13
    // Predicated region
    $region53: #{pixel_discriminator.3} parent=5 // pred_check
      %p1188 = pneg %p1187
    $region54: #{pixel_discriminator.3} parent=5 // pred_check_branch
      %1190 = sbr.rel (%p1188) target = $region56
    $region55: #{pixel_discriminator.3} parent=5 // pred_region
      %s1191 = ssub.s32 %s13, 2
      // Predicated region
      $region57: #{pixel_discriminator.3} parent=55 // pred_check
        %p1192 = pneg %p210
      $region58: #{pixel_discriminator.3} parent=55 // pred_check_branch
        %1194 = sbr.rel (%p1192) target = $region60
      $region59: #{pixel_discriminator.3} parent=55 // pred_region
        %s1195 = smul.u32 2, %s25
        %p1196 = scmp.lt.s32.totalorder %s24, 1
        %s1197 = scalar_select %p1196, %s24, 1
        %p1198 = scmp.lt.s32.totalorder %s1195, 1
        %s1199 = scalar_select %p1198, %s1195, 1
        %s1200 = smul.addr %s1197, 2
        %s1201 = sadd.s32 %s1199, %s1200
        %s1202 = scalar_lea.vmem %s7, %s1201
      $region60: #{pixel_discriminator.3} parent=55 // pred_fallthru
        _
    $region56: #{pixel_discriminator.3} parent=5 // pred_fallthru
      _
  $region6: #{pixel_discriminator.3} parent=0 // loop_footer
    %s17 = sadd.s32 1, %s13
  $region7: #{pixel_discriminator.3} parent=0 // loop_footer_branch
    %12 = sbr.rel target = $region3
  $region8: #{pixel_discriminator.3} parent=0 // loop_exit
    _

</llo_original>
